<compile_context>
chip_gen: v7x
topology: tpu7x:2x2x1
jax: 0.10.0
libtpu: 0.0.40
codegen_flags: <defaults>
</compile_context>

<pallas_src>
import jax
import jax.numpy as jnp
from jax.experimental import pallas as pl
from jax.experimental.pallas import tpu as pltpu


NEG_SLOPE = 0.01  # F.leaky_relu default negative_slope


def _leaky_relu(v):
    return jnp.where(v > 0, v, NEG_SLOPE * v)


def lstm_mlp_kernel(x_ref,           # [T, TB, H]   (features zero-padded to H)
                    w_ih_ref,        # [L, H, 4H]   (layer-0 rows >= inputSize are zero)
                    w_hh_ref,        # [L, H, 4H]
                    b_ref,           # [L, 1, 4H]   (b_ih + b_hh)
                    w1_ref, b1_ref,  # [H, N1], [1, N1]
                    w2_ref, b2_ref,  # [N1, N2], [1, N2]
                    w3_ref, b3_ref,  # [N2, NOP], [1, NOP]  (padded to 128 lanes)
                    out_ref):        # [TB, NOP]
    T, TB, H = x_ref.shape
    L = w_ih_ref.shape[0]
    f32 = jnp.float32

    def recur(gx_t, h, c, w_hh):
        # Only the hidden-state matmul lives on the serial recurrent path.
        gates = gx_t + jnp.dot(h, w_hh, preferred_element_type=f32)
        i = jax.nn.sigmoid(gates[:, 0 * H:1 * H])
        f = jax.nn.sigmoid(gates[:, 1 * H:2 * H])
        g = jnp.tanh(gates[:, 2 * H:3 * H])
        o = jax.nn.sigmoid(gates[:, 3 * H:4 * H])
        c = f * c + i * g
        h = o * jnp.tanh(c)
        return h, c

    # Layer 0 consumes x; deeper layers consume the previous layer's hidden sequence.
    # T and L are small static values -> fully unrolled for LLO scheduler visibility.
    seq_flat = x_ref[...].reshape(T * TB, H)      # row (t, b) -> t * TB + b
    h_last = None
    for l in range(L):
        w_ih = w_ih_ref[l]
        w_hh = w_hh_ref[l]
        b = b_ref[l]
        # Batched input projection for the whole sequence (off the recurrent path),
        # bias folded in.
        gx = jnp.dot(seq_flat, w_ih, preferred_element_type=f32) + b   # [T*TB, 4H]
        h = jnp.zeros((TB, H), f32)
        c = jnp.zeros((TB, H), f32)
        if l < L - 1:
            outs = []
            for t in range(T):
                h, c = recur(gx[t * TB:(t + 1) * TB, :], h, c, w_hh)
                outs.append(h)
            seq_flat = jnp.concatenate(outs, axis=0)
        else:
            # 'last' mode: only the final hidden state of the last layer is needed.
            for t in range(T):
                h, c = recur(gx[t * TB:(t + 1) * TB, :], h, c, w_hh)
            h_last = h

    # out = leaky_relu(lstm_out); take final time step, then the MLP head.
    h_last = _leaky_relu(h_last)
    h1 = _leaky_relu(jnp.dot(h_last, w1_ref[...], preferred_element_type=f32) + b1_ref[...])
    h2 = _leaky_relu(jnp.dot(h1, w2_ref[...], preferred_element_type=f32) + b2_ref[...])
    out = jnp.dot(h2, w3_ref[...], preferred_element_type=f32) + b3_ref[...]
    out_ref[...] = out.astype(out_ref.dtype)


def vanilla_lstm_forward(x, params, *, hidden_size, block_b=None):
    """x: [B, T, inputSize] f32.  Returns [B, 3]."""
    B, T, IN = x.shape
    H = hidden_size
    L = params["w_ih"].shape[0]
    N1 = params["w1"].shape[1]
    N2 = params["w2"].shape[1]
    NO = params["w3"].shape[1]
    NOP = max(128, ((NO + 127) // 128) * 128)   # lane-dense output store
    assert IN <= H, "kernel packs layer-0 input weights into the shared [H, 4H] layout"
    # TODO(synk): lastOrAll='all' head (flattened sequence) and dropRatio>0 training-time
    #             dropout between LSTM layers are not implemented (inference, 'last' mode).

    # Wrapper-side layout plumbing: time-major, feature dim zero-padded to H,
    # batch padded to a multiple of the batch tile, lin3 padded to 128 output lanes.
    if block_b is None:
        block_b = min(128, ((max(B, 8) + 7) // 8) * 8)
    block_b = ((block_b + 7) // 8) * 8
    Bp = ((B + block_b - 1) // block_b) * block_b
    xt = jnp.transpose(x, (1, 0, 2))                      # [T, B, IN]
    xt = jnp.pad(xt, ((0, 0), (0, Bp - B), (0, H - IN)))  # [T, Bp, H]
    w3p = jnp.pad(params["w3"], ((0, 0), (0, NOP - NO)))  # [N2, NOP]
    b3p = jnp.pad(params["b3"], ((0, 0), (0, NOP - NO)))  # [1, NOP]

    grid = (Bp // block_b,)
    const3 = lambda i: (0, 0, 0)
    const2 = lambda i: (0, 0)
    in_specs = [
        pl.BlockSpec((T, block_b, H), lambda i: (0, i, 0)),
        pl.BlockSpec((L, H, 4 * H), const3),
        pl.BlockSpec((L, H, 4 * H), const3),
        pl.BlockSpec((L, 1, 4 * H), const3),
        pl.BlockSpec((H, N1), const2),
        pl.BlockSpec((1, N1), const2),
        pl.BlockSpec((N1, N2), const2),
        pl.BlockSpec((1, N2), const2),
        pl.BlockSpec((N2, NOP), const2),
        pl.BlockSpec((1, NOP), const2),
    ]
    out_spec = pl.BlockSpec((block_b, NOP), lambda i: (i, 0))

    out = pl.pallas_call(
        lstm_mlp_kernel,
        out_shape=jax.ShapeDtypeStruct((Bp, NOP), jnp.float32),
        grid=grid,
        in_specs=in_specs,
        out_specs=out_spec,
        compiler_params=pltpu.CompilerParams(
            dimension_semantics=("parallel",)),
    )(xt,
      params["w_ih"], params["w_hh"], params["b"],
      params["w1"], params["b1"],
      params["w2"], params["b2"],
      w3p, b3p)
    return out[:B, :NO]


def init_params(key, input_size, hidden_size, num_layers, lin_num1, lin_num2, out_dim=3):
    """PyTorch-style uniform init, stored in kernel layout ([in, out] weights)."""
    H = hidden_size
    bound = 1.0 / float(H) ** 0.5
    w_ih, w_hh, bias = [], [], []
    for l in range(num_layers):
        in_l = input_size if l == 0 else H
        key, k1, k2, k3, k4 = jax.random.split(key, 5)
        wi = jax.random.uniform(k1, (in_l, 4 * H), jnp.float32, -bound, bound)
        wi = jnp.pad(wi, ((0, H - in_l), (0, 0)))   # zero rows pair with zero-padded inputs
        wh = jax.random.uniform(k2, (H, 4 * H), jnp.float32, -bound, bound)
        bi = jax.random.uniform(k3, (4 * H,), jnp.float32, -bound, bound)
        bh = jax.random.uniform(k4, (4 * H,), jnp.float32, -bound, bound)
        w_ih.append(wi)
        w_hh.append(wh)
        bias.append((bi + bh)[None, :])
    params = {"w_ih": jnp.stack(w_ih), "w_hh": jnp.stack(w_hh), "b": jnp.stack(bias)}
    dims = [(H, lin_num1), (lin_num1, lin_num2), (lin_num2, out_dim)]
    for i, (fi, fo) in enumerate(dims, start=1):
        key, kw, kb = jax.random.split(key, 3)
        lb = 1.0 / float(fi) ** 0.5
        params[f"w{i}"] = jax.random.uniform(kw, (fi, fo), jnp.float32, -lb, lb)
        params[f"b{i}"] = jax.random.uniform(kb, (1, fo), jnp.float32, -lb, lb)
    return params


def reference_forward(x, params, *, hidden_size):
    """Pure-JAX reference matching PyTorch LSTM (gate order i,f,g,o) + head."""
    B, T, IN = x.shape
    H = hidden_size
    L = params["w_ih"].shape[0]
    hp = jax.lax.Precision.HIGHEST
    layer_in = jnp.pad(x, ((0, 0), (0, 0), (0, H - IN)))   # [B, T, H]
    for l in range(L):
        h = jnp.zeros((B, H), jnp.float32)
        c = jnp.zeros((B, H), jnp.float32)
        outs = []
        for t in range(T):
            gates = (jnp.dot(layer_in[:, t, :], params["w_ih"][l], precision=hp)
                     + jnp.dot(h, params["w_hh"][l], precision=hp)
                     + params["b"][l])
            i = jax.nn.sigmoid(gates[:, 0 * H:1 * H])
            f = jax.nn.sigmoid(gates[:, 1 * H:2 * H])
            g = jnp.tanh(gates[:, 2 * H:3 * H])
            o = jax.nn.sigmoid(gates[:, 3 * H:4 * H])
            c = f * c + i * g
            h = o * jnp.tanh(c)
            outs.append(h)
        layer_in = jnp.stack(outs, axis=1)
    out = _leaky_relu(layer_in)
    h_last = out[:, -1, :]
    h1 = _leaky_relu(jnp.dot(h_last, params["w1"], precision=hp) + params["b1"])
    h2 = _leaky_relu(jnp.dot(h1, params["w2"], precision=hp) + params["b2"])
    return jnp.dot(h2, params["w3"], precision=hp) + params["b3"]


if __name__ == "__main__":
    key = jax.random.PRNGKey(0)
    input_size, hidden_size, num_layers = 4, 32, 2
    seq_len, lin_num1, lin_num2 = 8, 32, 16
    batch = 8

    k_x, k_p = jax.random.split(key)
    x = jax.random.normal(k_x, (batch, seq_len, input_size), jnp.float32)
    params = init_params(k_p, input_size, hidden_size, num_layers, lin_num1, lin_num2)

    out = vanilla_lstm_forward(x, params, hidden_size=hidden_size)
    out = jax.block_until_ready(out)

    ref = reference_forward(x, params, hidden_size=hidden_size)
    assert out.shape == (batch, 3)
    assert jnp.allclose(out, ref, atol=1e-4, rtol=1e-4), float(jnp.max(jnp.abs(out - ref)))

    print("KERNEL_OK")
</pallas_src>

<mosaic_0001>
module attributes {stable_mosaic.version = 11 : i64} {
  func.func @lstm_mlp_kernel(%arg0: i32, %arg1: memref<8x8x32xf32, #tpu.memory_space<vmem>>, %arg2: memref<2x32x128xf32, #tpu.memory_space<vmem>>, %arg3: memref<2x32x128xf32, #tpu.memory_space<vmem>>, %arg4: memref<2x1x128xf32, #tpu.memory_space<vmem>>, %arg5: memref<32x32xf32, #tpu.memory_space<vmem>>, %arg6: memref<1x32xf32, #tpu.memory_space<vmem>>, %arg7: memref<32x16xf32, #tpu.memory_space<vmem>>, %arg8: memref<1x16xf32, #tpu.memory_space<vmem>>, %arg9: memref<16x128xf32, #tpu.memory_space<vmem>>, %arg10: memref<1x128xf32, #tpu.memory_space<vmem>>, %arg11: memref<8x128xf32, #tpu.memory_space<vmem>>) attributes {dimension_semantics = [#tpu.dimension_semantics<parallel>], iteration_bounds = array<i64: 1>, scalar_prefetch = 0 : i64, scratch_operands = 0 : i64, tpu.core_type = #tpu.core_type<tc>, window_params = [{transform_indices = @transform_0, window_bounds = array<i64: 8, 8, 32>}, {pipeline_mode = #tpu.pipeline_mode<synchronous>, transform_indices = @transform_1, window_bounds = array<i64: 2, 32, 128>}, {pipeline_mode = #tpu.pipeline_mode<synchronous>, transform_indices = @transform_2, window_bounds = array<i64: 2, 32, 128>}, {pipeline_mode = #tpu.pipeline_mode<synchronous>, transform_indices = @transform_3, window_bounds = array<i64: 2, 1, 128>}, {pipeline_mode = #tpu.pipeline_mode<synchronous>, transform_indices = @transform_4, window_bounds = array<i64: 32, 32>}, {pipeline_mode = #tpu.pipeline_mode<synchronous>, transform_indices = @transform_5, window_bounds = array<i64: 1, 32>}, {pipeline_mode = #tpu.pipeline_mode<synchronous>, transform_indices = @transform_6, window_bounds = array<i64: 32, 16>}, {pipeline_mode = #tpu.pipeline_mode<synchronous>, transform_indices = @transform_7, window_bounds = array<i64: 1, 16>}, {pipeline_mode = #tpu.pipeline_mode<synchronous>, transform_indices = @transform_8, window_bounds = array<i64: 16, 128>}, {pipeline_mode = #tpu.pipeline_mode<synchronous>, transform_indices = @transform_9, window_bounds = array<i64: 1, 128>}, {transform_indices = @transform_10, window_bounds = array<i64: 8, 128>}]} {
    %c0 = arith.constant 0 : index
    %c0_0 = arith.constant 0 : index
    %c0_1 = arith.constant 0 : index
    %0 = vector.load %arg1[%c0, %c0_0, %c0_1] : memref<8x8x32xf32, #tpu.memory_space<vmem>>, vector<8x8x32xf32>
    %1 = vector.shape_cast %0 : vector<8x8x32xf32> to vector<64x32xf32>
    %c0_2 = arith.constant 0 : index
    %c0_3 = arith.constant 0 : index
    %c0_4 = arith.constant 0 : index
    %2 = vector.load %arg2[%c0_2, %c0_3, %c0_4] : memref<2x32x128xf32, #tpu.memory_space<vmem>>, vector<1x32x128xf32>
    %3 = vector.shape_cast %2 : vector<1x32x128xf32> to vector<32x128xf32>
    %c0_5 = arith.constant 0 : index
    %c0_6 = arith.constant 0 : index
    %c0_7 = arith.constant 0 : index
    %4 = vector.load %arg3[%c0_5, %c0_6, %c0_7] : memref<2x32x128xf32, #tpu.memory_space<vmem>>, vector<1x32x128xf32>
    %5 = vector.shape_cast %4 : vector<1x32x128xf32> to vector<32x128xf32>
    %c0_8 = arith.constant 0 : index
    %c0_9 = arith.constant 0 : index
    %c0_10 = arith.constant 0 : index
    %6 = vector.load %arg4[%c0_8, %c0_9, %c0_10] : memref<2x1x128xf32, #tpu.memory_space<vmem>>, vector<1x1x128xf32>
    %7 = vector.shape_cast %6 : vector<1x1x128xf32> to vector<1x128xf32>
    %cst = arith.constant dense<0.000000e+00> : vector<64x128xf32>
    %8 = tpu.matmul %1, %3, %cst {dimension_numbers = #tpu.dot_dimension_numbers<[1], [0], [0], [1], [0, 0, 1, 1], [], []>} : vector<64x32xf32>, vector<32x128xf32>, vector<64x128xf32> -> vector<64x128xf32>
    %9 = vector.broadcast %7 : vector<1x128xf32> to vector<64x128xf32>
    %10 = arith.addf %8, %9 : vector<64x128xf32>
    %cst_11 = arith.constant 0.000000e+00 : f32
    %11 = vector.broadcast %cst_11 : f32 to vector<8x32xf32>
    %cst_12 = arith.constant 0.000000e+00 : f32
    %12 = vector.broadcast %cst_12 : f32 to vector<8x32xf32>
    %13 = vector.extract_strided_slice %10 {offsets = [0, 0], sizes = [8, 128], strides = [1, 1]} : vector<64x128xf32> to vector<8x128xf32>
    %cst_13 = arith.constant dense<0.000000e+00> : vector<8x128xf32>
    %14 = tpu.matmul %11, %5, %cst_13 {dimension_numbers = #tpu.dot_dimension_numbers<[1], [0], [0], [1], [0, 0, 1, 1], [], []>} : vector<8x32xf32>, vector<32x128xf32>, vector<8x128xf32> -> vector<8x128xf32>
    %15 = arith.addf %13, %14 : vector<8x128xf32>
    %16 = vector.extract_strided_slice %15 {offsets = [0, 0], sizes = [8, 32], strides = [1, 1]} : vector<8x128xf32> to vector<8x32xf32>
    %17 = arith.negf %16 : vector<8x32xf32>
    %18 = math.exp %17 : vector<8x32xf32>
    %cst_14 = arith.constant 1.000000e+00 : f32
    %19 = vector.broadcast %cst_14 : f32 to vector<8x32xf32>
    %20 = arith.addf %19, %18 : vector<8x32xf32>
    %21 = arith.divf %19, %20 : vector<8x32xf32>
    %22 = vector.extract_strided_slice %15 {offsets = [0, 32], sizes = [8, 32], strides = [1, 1]} : vector<8x128xf32> to vector<8x32xf32>
    %23 = arith.negf %22 : vector<8x32xf32>
    %24 = math.exp %23 : vector<8x32xf32>
    %cst_15 = arith.constant 1.000000e+00 : f32
    %25 = vector.broadcast %cst_15 : f32 to vector<8x32xf32>
    %26 = arith.addf %25, %24 : vector<8x32xf32>
    %27 = arith.divf %25, %26 : vector<8x32xf32>
    %28 = vector.extract_strided_slice %15 {offsets = [0, 64], sizes = [8, 32], strides = [1, 1]} : vector<8x128xf32> to vector<8x32xf32>
    %29 = math.tanh %28 : vector<8x32xf32>
    %30 = vector.extract_strided_slice %15 {offsets = [0, 96], sizes = [8, 32], strides = [1, 1]} : vector<8x128xf32> to vector<8x32xf32>
    %31 = arith.negf %30 : vector<8x32xf32>
    %32 = math.exp %31 : vector<8x32xf32>
    %cst_16 = arith.constant 1.000000e+00 : f32
    %33 = vector.broadcast %cst_16 : f32 to vector<8x32xf32>
    %34 = arith.addf %33, %32 : vector<8x32xf32>
    %35 = arith.divf %33, %34 : vector<8x32xf32>
    %36 = arith.mulf %27, %12 : vector<8x32xf32>
    %37 = arith.mulf %21, %29 : vector<8x32xf32>
    %38 = arith.addf %36, %37 : vector<8x32xf32>
    %39 = math.tanh %38 : vector<8x32xf32>
    %40 = arith.mulf %35, %39 : vector<8x32xf32>
    %41 = vector.extract_strided_slice %10 {offsets = [8, 0], sizes = [8, 128], strides = [1, 1]} : vector<64x128xf32> to vector<8x128xf32>
    %cst_17 = arith.constant dense<0.000000e+00> : vector<8x128xf32>
    %42 = tpu.matmul %40, %5, %cst_17 {dimension_numbers = #tpu.dot_dimension_numbers<[1], [0], [0], [1], [0, 0, 1, 1], [], []>} : vector<8x32xf32>, vector<32x128xf32>, vector<8x128xf32> -> vector<8x128xf32>
    %43 = arith.addf %41, %42 : vector<8x128xf32>
    %44 = vector.extract_strided_slice %43 {offsets = [0, 0], sizes = [8, 32], strides = [1, 1]} : vector<8x128xf32> to vector<8x32xf32>
    %45 = arith.negf %44 : vector<8x32xf32>
    %46 = math.exp %45 : vector<8x32xf32>
    %cst_18 = arith.constant 1.000000e+00 : f32
    %47 = vector.broadcast %cst_18 : f32 to vector<8x32xf32>
    %48 = arith.addf %47, %46 : vector<8x32xf32>
    %49 = arith.divf %47, %48 : vector<8x32xf32>
    %50 = vector.extract_strided_slice %43 {offsets = [0, 32], sizes = [8, 32], strides = [1, 1]} : vector<8x128xf32> to vector<8x32xf32>
    %51 = arith.negf %50 : vector<8x32xf32>
    %52 = math.exp %51 : vector<8x32xf32>
    %cst_19 = arith.constant 1.000000e+00 : f32
    %53 = vector.broadcast %cst_19 : f32 to vector<8x32xf32>
    %54 = arith.addf %53, %52 : vector<8x32xf32>
    %55 = arith.divf %53, %54 : vector<8x32xf32>
    %56 = vector.extract_strided_slice %43 {offsets = [0, 64], sizes = [8, 32], strides = [1, 1]} : vector<8x128xf32> to vector<8x32xf32>
    %57 = math.tanh %56 : vector<8x32xf32>
    %58 = vector.extract_strided_slice %43 {offsets = [0, 96], sizes = [8, 32], strides = [1, 1]} : vector<8x128xf32> to vector<8x32xf32>
    %59 = arith.negf %58 : vector<8x32xf32>
    %60 = math.exp %59 : vector<8x32xf32>
    %cst_20 = arith.constant 1.000000e+00 : f32
    %61 = vector.broadcast %cst_20 : f32 to vector<8x32xf32>
    %62 = arith.addf %61, %60 : vector<8x32xf32>
    %63 = arith.divf %61, %62 : vector<8x32xf32>
    %64 = arith.mulf %55, %38 : vector<8x32xf32>
    %65 = arith.mulf %49, %57 : vector<8x32xf32>
    %66 = arith.addf %64, %65 : vector<8x32xf32>
    %67 = math.tanh %66 : vector<8x32xf32>
    %68 = arith.mulf %63, %67 : vector<8x32xf32>
    %69 = vector.extract_strided_slice %10 {offsets = [16, 0], sizes = [8, 128], strides = [1, 1]} : vector<64x128xf32> to vector<8x128xf32>
    %cst_21 = arith.constant dense<0.000000e+00> : vector<8x128xf32>
    %70 = tpu.matmul %68, %5, %cst_21 {dimension_numbers = #tpu.dot_dimension_numbers<[1], [0], [0], [1], [0, 0, 1, 1], [], []>} : vector<8x32xf32>, vector<32x128xf32>, vector<8x128xf32> -> vector<8x128xf32>
    %71 = arith.addf %69, %70 : vector<8x128xf32>
    %72 = vector.extract_strided_slice %71 {offsets = [0, 0], sizes = [8, 32], strides = [1, 1]} : vector<8x128xf32> to vector<8x32xf32>
    %73 = arith.negf %72 : vector<8x32xf32>
    %74 = math.exp %73 : vector<8x32xf32>
    %cst_22 = arith.constant 1.000000e+00 : f32
    %75 = vector.broadcast %cst_22 : f32 to vector<8x32xf32>
    %76 = arith.addf %75, %74 : vector<8x32xf32>
    %77 = arith.divf %75, %76 : vector<8x32xf32>
    %78 = vector.extract_strided_slice %71 {offsets = [0, 32], sizes = [8, 32], strides = [1, 1]} : vector<8x128xf32> to vector<8x32xf32>
    %79 = arith.negf %78 : vector<8x32xf32>
    %80 = math.exp %79 : vector<8x32xf32>
    %cst_23 = arith.constant 1.000000e+00 : f32
    %81 = vector.broadcast %cst_23 : f32 to vector<8x32xf32>
    %82 = arith.addf %81, %80 : vector<8x32xf32>
    %83 = arith.divf %81, %82 : vector<8x32xf32>
    %84 = vector.extract_strided_slice %71 {offsets = [0, 64], sizes = [8, 32], strides = [1, 1]} : vector<8x128xf32> to vector<8x32xf32>
    %85 = math.tanh %84 : vector<8x32xf32>
    %86 = vector.extract_strided_slice %71 {offsets = [0, 96], sizes = [8, 32], strides = [1, 1]} : vector<8x128xf32> to vector<8x32xf32>
    %87 = arith.negf %86 : vector<8x32xf32>
    %88 = math.exp %87 : vector<8x32xf32>
    %cst_24 = arith.constant 1.000000e+00 : f32
    %89 = vector.broadcast %cst_24 : f32 to vector<8x32xf32>
    %90 = arith.addf %89, %88 : vector<8x32xf32>
    %91 = arith.divf %89, %90 : vector<8x32xf32>
    %92 = arith.mulf %83, %66 : vector<8x32xf32>
    %93 = arith.mulf %77, %85 : vector<8x32xf32>
    %94 = arith.addf %92, %93 : vector<8x32xf32>
    %95 = math.tanh %94 : vector<8x32xf32>
    %96 = arith.mulf %91, %95 : vector<8x32xf32>
    %97 = vector.extract_strided_slice %10 {offsets = [24, 0], sizes = [8, 128], strides = [1, 1]} : vector<64x128xf32> to vector<8x128xf32>
    %cst_25 = arith.constant dense<0.000000e+00> : vector<8x128xf32>
    %98 = tpu.matmul %96, %5, %cst_25 {dimension_numbers = #tpu.dot_dimension_numbers<[1], [0], [0], [1], [0, 0, 1, 1], [], []>} : vector<8x32xf32>, vector<32x128xf32>, vector<8x128xf32> -> vector<8x128xf32>
    %99 = arith.addf %97, %98 : vector<8x128xf32>
    %100 = vector.extract_strided_slice %99 {offsets = [0, 0], sizes = [8, 32], strides = [1, 1]} : vector<8x128xf32> to vector<8x32xf32>
    %101 = arith.negf %100 : vector<8x32xf32>
    %102 = math.exp %101 : vector<8x32xf32>
    %cst_26 = arith.constant 1.000000e+00 : f32
    %103 = vector.broadcast %cst_26 : f32 to vector<8x32xf32>
    %104 = arith.addf %103, %102 : vector<8x32xf32>
    %105 = arith.divf %103, %104 : vector<8x32xf32>
    %106 = vector.extract_strided_slice %99 {offsets = [0, 32], sizes = [8, 32], strides = [1, 1]} : vector<8x128xf32> to vector<8x32xf32>
    %107 = arith.negf %106 : vector<8x32xf32>
    %108 = math.exp %107 : vector<8x32xf32>
    %cst_27 = arith.constant 1.000000e+00 : f32
    %109 = vector.broadcast %cst_27 : f32 to vector<8x32xf32>
    %110 = arith.addf %109, %108 : vector<8x32xf32>
    %111 = arith.divf %109, %110 : vector<8x32xf32>
    %112 = vector.extract_strided_slice %99 {offsets = [0, 64], sizes = [8, 32], strides = [1, 1]} : vector<8x128xf32> to vector<8x32xf32>
    %113 = math.tanh %112 : vector<8x32xf32>
    %114 = vector.extract_strided_slice %99 {offsets = [0, 96], sizes = [8, 32], strides = [1, 1]} : vector<8x128xf32> to vector<8x32xf32>
    %115 = arith.negf %114 : vector<8x32xf32>
    %116 = math.exp %115 : vector<8x32xf32>
    %cst_28 = arith.constant 1.000000e+00 : f32
    %117 = vector.broadcast %cst_28 : f32 to vector<8x32xf32>
    %118 = arith.addf %117, %116 : vector<8x32xf32>
    %119 = arith.divf %117, %118 : vector<8x32xf32>
    %120 = arith.mulf %111, %94 : vector<8x32xf32>
    %121 = arith.mulf %105, %113 : vector<8x32xf32>
    %122 = arith.addf %120, %121 : vector<8x32xf32>
    %123 = math.tanh %122 : vector<8x32xf32>
    %124 = arith.mulf %119, %123 : vector<8x32xf32>
    %125 = vector.extract_strided_slice %10 {offsets = [32, 0], sizes = [8, 128], strides = [1, 1]} : vector<64x128xf32> to vector<8x128xf32>
    %cst_29 = arith.constant dense<0.000000e+00> : vector<8x128xf32>
    %126 = tpu.matmul %124, %5, %cst_29 {dimension_numbers = #tpu.dot_dimension_numbers<[1], [0], [0], [1], [0, 0, 1, 1], [], []>} : vector<8x32xf32>, vector<32x128xf32>, vector<8x128xf32> -> vector<8x128xf32>
    %127 = arith.addf %125, %126 : vector<8x128xf32>
    %128 = vector.extract_strided_slice %127 {offsets = [0, 0], sizes = [8, 32], strides = [1, 1]} : vector<8x128xf32> to vector<8x32xf32>
    %129 = arith.negf %128 : vector<8x32xf32>
    %130 = math.exp %129 : vector<8x32xf32>
    %cst_30 = arith.constant 1.000000e+00 : f32
    %131 = vector.broadcast %cst_30 : f32 to vector<8x32xf32>
    %132 = arith.addf %131, %130 : vector<8x32xf32>
    %133 = arith.divf %131, %132 : vector<8x32xf32>
    %134 = vector.extract_strided_slice %127 {offsets = [0, 32], sizes = [8, 32], strides = [1, 1]} : vector<8x128xf32> to vector<8x32xf32>
    %135 = arith.negf %134 : vector<8x32xf32>
    %136 = math.exp %135 : vector<8x32xf32>
    %cst_31 = arith.constant 1.000000e+00 : f32
    %137 = vector.broadcast %cst_31 : f32 to vector<8x32xf32>
    %138 = arith.addf %137, %136 : vector<8x32xf32>
    %139 = arith.divf %137, %138 : vector<8x32xf32>
    %140 = vector.extract_strided_slice %127 {offsets = [0, 64], sizes = [8, 32], strides = [1, 1]} : vector<8x128xf32> to vector<8x32xf32>
    %141 = math.tanh %140 : vector<8x32xf32>
    %142 = vector.extract_strided_slice %127 {offsets = [0, 96], sizes = [8, 32], strides = [1, 1]} : vector<8x128xf32> to vector<8x32xf32>
    %143 = arith.negf %142 : vector<8x32xf32>
    %144 = math.exp %143 : vector<8x32xf32>
    %cst_32 = arith.constant 1.000000e+00 : f32
    %145 = vector.broadcast %cst_32 : f32 to vector<8x32xf32>
    %146 = arith.addf %145, %144 : vector<8x32xf32>
    %147 = arith.divf %145, %146 : vector<8x32xf32>
    %148 = arith.mulf %139, %122 : vector<8x32xf32>
    %149 = arith.mulf %133, %141 : vector<8x32xf32>
    %150 = arith.addf %148, %149 : vector<8x32xf32>
    %151 = math.tanh %150 : vector<8x32xf32>
    %152 = arith.mulf %147, %151 : vector<8x32xf32>
    %153 = vector.extract_strided_slice %10 {offsets = [40, 0], sizes = [8, 128], strides = [1, 1]} : vector<64x128xf32> to vector<8x128xf32>
    %cst_33 = arith.constant dense<0.000000e+00> : vector<8x128xf32>
    %154 = tpu.matmul %152, %5, %cst_33 {dimension_numbers = #tpu.dot_dimension_numbers<[1], [0], [0], [1], [0, 0, 1, 1], [], []>} : vector<8x32xf32>, vector<32x128xf32>, vector<8x128xf32> -> vector<8x128xf32>
    %155 = arith.addf %153, %154 : vector<8x128xf32>
    %156 = vector.extract_strided_slice %155 {offsets = [0, 0], sizes = [8, 32], strides = [1, 1]} : vector<8x128xf32> to vector<8x32xf32>
    %157 = arith.negf %156 : vector<8x32xf32>
    %158 = math.exp %157 : vector<8x32xf32>
    %cst_34 = arith.constant 1.000000e+00 : f32
    %159 = vector.broadcast %cst_34 : f32 to vector<8x32xf32>
    %160 = arith.addf %159, %158 : vector<8x32xf32>
    %161 = arith.divf %159, %160 : vector<8x32xf32>
    %162 = vector.extract_strided_slice %155 {offsets = [0, 32], sizes = [8, 32], strides = [1, 1]} : vector<8x128xf32> to vector<8x32xf32>
    %163 = arith.negf %162 : vector<8x32xf32>
    %164 = math.exp %163 : vector<8x32xf32>
    %cst_35 = arith.constant 1.000000e+00 : f32
    %165 = vector.broadcast %cst_35 : f32 to vector<8x32xf32>
    %166 = arith.addf %165, %164 : vector<8x32xf32>
    %167 = arith.divf %165, %166 : vector<8x32xf32>
    %168 = vector.extract_strided_slice %155 {offsets = [0, 64], sizes = [8, 32], strides = [1, 1]} : vector<8x128xf32> to vector<8x32xf32>
    %169 = math.tanh %168 : vector<8x32xf32>
    %170 = vector.extract_strided_slice %155 {offsets = [0, 96], sizes = [8, 32], strides = [1, 1]} : vector<8x128xf32> to vector<8x32xf32>
    %171 = arith.negf %170 : vector<8x32xf32>
    %172 = math.exp %171 : vector<8x32xf32>
    %cst_36 = arith.constant 1.000000e+00 : f32
    %173 = vector.broadcast %cst_36 : f32 to vector<8x32xf32>
    %174 = arith.addf %173, %172 : vector<8x32xf32>
    %175 = arith.divf %173, %174 : vector<8x32xf32>
    %176 = arith.mulf %167, %150 : vector<8x32xf32>
    %177 = arith.mulf %161, %169 : vector<8x32xf32>
    %178 = arith.addf %176, %177 : vector<8x32xf32>
    %179 = math.tanh %178 : vector<8x32xf32>
    %180 = arith.mulf %175, %179 : vector<8x32xf32>
    %181 = vector.extract_strided_slice %10 {offsets = [48, 0], sizes = [8, 128], strides = [1, 1]} : vector<64x128xf32> to vector<8x128xf32>
    %cst_37 = arith.constant dense<0.000000e+00> : vector<8x128xf32>
    %182 = tpu.matmul %180, %5, %cst_37 {dimension_numbers = #tpu.dot_dimension_numbers<[1], [0], [0], [1], [0, 0, 1, 1], [], []>} : vector<8x32xf32>, vector<32x128xf32>, vector<8x128xf32> -> vector<8x128xf32>
    %183 = arith.addf %181, %182 : vector<8x128xf32>
    %184 = vector.extract_strided_slice %183 {offsets = [0, 0], sizes = [8, 32], strides = [1, 1]} : vector<8x128xf32> to vector<8x32xf32>
    %185 = arith.negf %184 : vector<8x32xf32>
    %186 = math.exp %185 : vector<8x32xf32>
    %cst_38 = arith.constant 1.000000e+00 : f32
    %187 = vector.broadcast %cst_38 : f32 to vector<8x32xf32>
    %188 = arith.addf %187, %186 : vector<8x32xf32>
    %189 = arith.divf %187, %188 : vector<8x32xf32>
    %190 = vector.extract_strided_slice %183 {offsets = [0, 32], sizes = [8, 32], strides = [1, 1]} : vector<8x128xf32> to vector<8x32xf32>
    %191 = arith.negf %190 : vector<8x32xf32>
    %192 = math.exp %191 : vector<8x32xf32>
    %cst_39 = arith.constant 1.000000e+00 : f32
    %193 = vector.broadcast %cst_39 : f32 to vector<8x32xf32>
    %194 = arith.addf %193, %192 : vector<8x32xf32>
    %195 = arith.divf %193, %194 : vector<8x32xf32>
    %196 = vector.extract_strided_slice %183 {offsets = [0, 64], sizes = [8, 32], strides = [1, 1]} : vector<8x128xf32> to vector<8x32xf32>
    %197 = math.tanh %196 : vector<8x32xf32>
    %198 = vector.extract_strided_slice %183 {offsets = [0, 96], sizes = [8, 32], strides = [1, 1]} : vector<8x128xf32> to vector<8x32xf32>
    %199 = arith.negf %198 : vector<8x32xf32>
    %200 = math.exp %199 : vector<8x32xf32>
    %cst_40 = arith.constant 1.000000e+00 : f32
    %201 = vector.broadcast %cst_40 : f32 to vector<8x32xf32>
    %202 = arith.addf %201, %200 : vector<8x32xf32>
    %203 = arith.divf %201, %202 : vector<8x32xf32>
    %204 = arith.mulf %195, %178 : vector<8x32xf32>
    %205 = arith.mulf %189, %197 : vector<8x32xf32>
    %206 = arith.addf %204, %205 : vector<8x32xf32>
    %207 = math.tanh %206 : vector<8x32xf32>
    %208 = arith.mulf %203, %207 : vector<8x32xf32>
    %209 = vector.extract_strided_slice %10 {offsets = [56, 0], sizes = [8, 128], strides = [1, 1]} : vector<64x128xf32> to vector<8x128xf32>
    %cst_41 = arith.constant dense<0.000000e+00> : vector<8x128xf32>
    %210 = tpu.matmul %208, %5, %cst_41 {dimension_numbers = #tpu.dot_dimension_numbers<[1], [0], [0], [1], [0, 0, 1, 1], [], []>} : vector<8x32xf32>, vector<32x128xf32>, vector<8x128xf32> -> vector<8x128xf32>
    %211 = arith.addf %209, %210 : vector<8x128xf32>
    %212 = vector.extract_strided_slice %211 {offsets = [0, 0], sizes = [8, 32], strides = [1, 1]} : vector<8x128xf32> to vector<8x32xf32>
    %213 = arith.negf %212 : vector<8x32xf32>
    %214 = math.exp %213 : vector<8x32xf32>
    %cst_42 = arith.constant 1.000000e+00 : f32
    %215 = vector.broadcast %cst_42 : f32 to vector<8x32xf32>
    %216 = arith.addf %215, %214 : vector<8x32xf32>
    %217 = arith.divf %215, %216 : vector<8x32xf32>
    %218 = vector.extract_strided_slice %211 {offsets = [0, 32], sizes = [8, 32], strides = [1, 1]} : vector<8x128xf32> to vector<8x32xf32>
    %219 = arith.negf %218 : vector<8x32xf32>
    %220 = math.exp %219 : vector<8x32xf32>
    %cst_43 = arith.constant 1.000000e+00 : f32
    %221 = vector.broadcast %cst_43 : f32 to vector<8x32xf32>
    %222 = arith.addf %221, %220 : vector<8x32xf32>
    %223 = arith.divf %221, %222 : vector<8x32xf32>
    %224 = vector.extract_strided_slice %211 {offsets = [0, 64], sizes = [8, 32], strides = [1, 1]} : vector<8x128xf32> to vector<8x32xf32>
    %225 = math.tanh %224 : vector<8x32xf32>
    %226 = vector.extract_strided_slice %211 {offsets = [0, 96], sizes = [8, 32], strides = [1, 1]} : vector<8x128xf32> to vector<8x32xf32>
    %227 = arith.negf %226 : vector<8x32xf32>
    %228 = math.exp %227 : vector<8x32xf32>
    %cst_44 = arith.constant 1.000000e+00 : f32
    %229 = vector.broadcast %cst_44 : f32 to vector<8x32xf32>
    %230 = arith.addf %229, %228 : vector<8x32xf32>
    %231 = arith.divf %229, %230 : vector<8x32xf32>
    %232 = arith.mulf %223, %206 : vector<8x32xf32>
    %233 = arith.mulf %217, %225 : vector<8x32xf32>
    %234 = arith.addf %232, %233 : vector<8x32xf32>
    %235 = math.tanh %234 : vector<8x32xf32>
    %236 = arith.mulf %231, %235 : vector<8x32xf32>
    %237 = tpu.concatenate %40, %68, %96, %124, %152, %180, %208, %236 in 0 : vector<8x32xf32>, vector<8x32xf32>, vector<8x32xf32>, vector<8x32xf32>, vector<8x32xf32>, vector<8x32xf32>, vector<8x32xf32>, vector<8x32xf32> -> vector<64x32xf32>
    %c1 = arith.constant 1 : index
    %c0_45 = arith.constant 0 : index
    %c0_46 = arith.constant 0 : index
    %238 = vector.load %arg2[%c1, %c0_45, %c0_46] : memref<2x32x128xf32, #tpu.memory_space<vmem>>, vector<1x32x128xf32>
    %239 = vector.shape_cast %238 : vector<1x32x128xf32> to vector<32x128xf32>
    %c1_47 = arith.constant 1 : index
    %c0_48 = arith.constant 0 : index
    %c0_49 = arith.constant 0 : index
    %240 = vector.load %arg3[%c1_47, %c0_48, %c0_49] : memref<2x32x128xf32, #tpu.memory_space<vmem>>, vector<1x32x128xf32>
    %241 = vector.shape_cast %240 : vector<1x32x128xf32> to vector<32x128xf32>
    %c1_50 = arith.constant 1 : index
    %c0_51 = arith.constant 0 : index
    %c0_52 = arith.constant 0 : index
    %242 = vector.load %arg4[%c1_50, %c0_51, %c0_52] : memref<2x1x128xf32, #tpu.memory_space<vmem>>, vector<1x1x128xf32>
    %243 = vector.shape_cast %242 : vector<1x1x128xf32> to vector<1x128xf32>
    %cst_53 = arith.constant dense<0.000000e+00> : vector<64x128xf32>
    %244 = tpu.matmul %237, %239, %cst_53 {dimension_numbers = #tpu.dot_dimension_numbers<[1], [0], [0], [1], [0, 0, 1, 1], [], []>} : vector<64x32xf32>, vector<32x128xf32>, vector<64x128xf32> -> vector<64x128xf32>
    %245 = vector.broadcast %243 : vector<1x128xf32> to vector<64x128xf32>
    %246 = arith.addf %244, %245 : vector<64x128xf32>
    %cst_54 = arith.constant 0.000000e+00 : f32
    %247 = vector.broadcast %cst_54 : f32 to vector<8x32xf32>
    %cst_55 = arith.constant 0.000000e+00 : f32
    %248 = vector.broadcast %cst_55 : f32 to vector<8x32xf32>
    %249 = vector.extract_strided_slice %246 {offsets = [0, 0], sizes = [8, 128], strides = [1, 1]} : vector<64x128xf32> to vector<8x128xf32>
    %cst_56 = arith.constant dense<0.000000e+00> : vector<8x128xf32>
    %250 = tpu.matmul %247, %241, %cst_56 {dimension_numbers = #tpu.dot_dimension_numbers<[1], [0], [0], [1], [0, 0, 1, 1], [], []>} : vector<8x32xf32>, vector<32x128xf32>, vector<8x128xf32> -> vector<8x128xf32>
    %251 = arith.addf %249, %250 : vector<8x128xf32>
    %252 = vector.extract_strided_slice %251 {offsets = [0, 0], sizes = [8, 32], strides = [1, 1]} : vector<8x128xf32> to vector<8x32xf32>
    %253 = arith.negf %252 : vector<8x32xf32>
    %254 = math.exp %253 : vector<8x32xf32>
    %cst_57 = arith.constant 1.000000e+00 : f32
    %255 = vector.broadcast %cst_57 : f32 to vector<8x32xf32>
    %256 = arith.addf %255, %254 : vector<8x32xf32>
    %257 = arith.divf %255, %256 : vector<8x32xf32>
    %258 = vector.extract_strided_slice %251 {offsets = [0, 32], sizes = [8, 32], strides = [1, 1]} : vector<8x128xf32> to vector<8x32xf32>
    %259 = arith.negf %258 : vector<8x32xf32>
    %260 = math.exp %259 : vector<8x32xf32>
    %cst_58 = arith.constant 1.000000e+00 : f32
    %261 = vector.broadcast %cst_58 : f32 to vector<8x32xf32>
    %262 = arith.addf %261, %260 : vector<8x32xf32>
    %263 = arith.divf %261, %262 : vector<8x32xf32>
    %264 = vector.extract_strided_slice %251 {offsets = [0, 64], sizes = [8, 32], strides = [1, 1]} : vector<8x128xf32> to vector<8x32xf32>
    %265 = math.tanh %264 : vector<8x32xf32>
    %266 = vector.extract_strided_slice %251 {offsets = [0, 96], sizes = [8, 32], strides = [1, 1]} : vector<8x128xf32> to vector<8x32xf32>
    %267 = arith.negf %266 : vector<8x32xf32>
    %268 = math.exp %267 : vector<8x32xf32>
    %cst_59 = arith.constant 1.000000e+00 : f32
    %269 = vector.broadcast %cst_59 : f32 to vector<8x32xf32>
    %270 = arith.addf %269, %268 : vector<8x32xf32>
    %271 = arith.divf %269, %270 : vector<8x32xf32>
    %272 = arith.mulf %263, %248 : vector<8x32xf32>
    %273 = arith.mulf %257, %265 : vector<8x32xf32>
    %274 = arith.addf %272, %273 : vector<8x32xf32>
    %275 = math.tanh %274 : vector<8x32xf32>
    %276 = arith.mulf %271, %275 : vector<8x32xf32>
    %277 = vector.extract_strided_slice %246 {offsets = [8, 0], sizes = [8, 128], strides = [1, 1]} : vector<64x128xf32> to vector<8x128xf32>
    %cst_60 = arith.constant dense<0.000000e+00> : vector<8x128xf32>
    %278 = tpu.matmul %276, %241, %cst_60 {dimension_numbers = #tpu.dot_dimension_numbers<[1], [0], [0], [1], [0, 0, 1, 1], [], []>} : vector<8x32xf32>, vector<32x128xf32>, vector<8x128xf32> -> vector<8x128xf32>
    %279 = arith.addf %277, %278 : vector<8x128xf32>
    %280 = vector.extract_strided_slice %279 {offsets = [0, 0], sizes = [8, 32], strides = [1, 1]} : vector<8x128xf32> to vector<8x32xf32>
    %281 = arith.negf %280 : vector<8x32xf32>
    %282 = math.exp %281 : vector<8x32xf32>
    %cst_61 = arith.constant 1.000000e+00 : f32
    %283 = vector.broadcast %cst_61 : f32 to vector<8x32xf32>
    %284 = arith.addf %283, %282 : vector<8x32xf32>
    %285 = arith.divf %283, %284 : vector<8x32xf32>
    %286 = vector.extract_strided_slice %279 {offsets = [0, 32], sizes = [8, 32], strides = [1, 1]} : vector<8x128xf32> to vector<8x32xf32>
    %287 = arith.negf %286 : vector<8x32xf32>
    %288 = math.exp %287 : vector<8x32xf32>
    %cst_62 = arith.constant 1.000000e+00 : f32
    %289 = vector.broadcast %cst_62 : f32 to vector<8x32xf32>
    %290 = arith.addf %289, %288 : vector<8x32xf32>
    %291 = arith.divf %289, %290 : vector<8x32xf32>
    %292 = vector.extract_strided_slice %279 {offsets = [0, 64], sizes = [8, 32], strides = [1, 1]} : vector<8x128xf32> to vector<8x32xf32>
    %293 = math.tanh %292 : vector<8x32xf32>
    %294 = vector.extract_strided_slice %279 {offsets = [0, 96], sizes = [8, 32], strides = [1, 1]} : vector<8x128xf32> to vector<8x32xf32>
    %295 = arith.negf %294 : vector<8x32xf32>
    %296 = math.exp %295 : vector<8x32xf32>
    %cst_63 = arith.constant 1.000000e+00 : f32
    %297 = vector.broadcast %cst_63 : f32 to vector<8x32xf32>
    %298 = arith.addf %297, %296 : vector<8x32xf32>
    %299 = arith.divf %297, %298 : vector<8x32xf32>
    %300 = arith.mulf %291, %274 : vector<8x32xf32>
    %301 = arith.mulf %285, %293 : vector<8x32xf32>
    %302 = arith.addf %300, %301 : vector<8x32xf32>
    %303 = math.tanh %302 : vector<8x32xf32>
    %304 = arith.mulf %299, %303 : vector<8x32xf32>
    %305 = vector.extract_strided_slice %246 {offsets = [16, 0], sizes = [8, 128], strides = [1, 1]} : vector<64x128xf32> to vector<8x128xf32>
    %cst_64 = arith.constant dense<0.000000e+00> : vector<8x128xf32>
    %306 = tpu.matmul %304, %241, %cst_64 {dimension_numbers = #tpu.dot_dimension_numbers<[1], [0], [0], [1], [0, 0, 1, 1], [], []>} : vector<8x32xf32>, vector<32x128xf32>, vector<8x128xf32> -> vector<8x128xf32>
    %307 = arith.addf %305, %306 : vector<8x128xf32>
    %308 = vector.extract_strided_slice %307 {offsets = [0, 0], sizes = [8, 32], strides = [1, 1]} : vector<8x128xf32> to vector<8x32xf32>
    %309 = arith.negf %308 : vector<8x32xf32>
    %310 = math.exp %309 : vector<8x32xf32>
    %cst_65 = arith.constant 1.000000e+00 : f32
    %311 = vector.broadcast %cst_65 : f32 to vector<8x32xf32>
    %312 = arith.addf %311, %310 : vector<8x32xf32>
    %313 = arith.divf %311, %312 : vector<8x32xf32>
    %314 = vector.extract_strided_slice %307 {offsets = [0, 32], sizes = [8, 32], strides = [1, 1]} : vector<8x128xf32> to vector<8x32xf32>
    %315 = arith.negf %314 : vector<8x32xf32>
    %316 = math.exp %315 : vector<8x32xf32>
    %cst_66 = arith.constant 1.000000e+00 : f32
    %317 = vector.broadcast %cst_66 : f32 to vector<8x32xf32>
    %318 = arith.addf %317, %316 : vector<8x32xf32>
    %319 = arith.divf %317, %318 : vector<8x32xf32>
    %320 = vector.extract_strided_slice %307 {offsets = [0, 64], sizes = [8, 32], strides = [1, 1]} : vector<8x128xf32> to vector<8x32xf32>
    %321 = math.tanh %320 : vector<8x32xf32>
    %322 = vector.extract_strided_slice %307 {offsets = [0, 96], sizes = [8, 32], strides = [1, 1]} : vector<8x128xf32> to vector<8x32xf32>
    %323 = arith.negf %322 : vector<8x32xf32>
    %324 = math.exp %323 : vector<8x32xf32>
    %cst_67 = arith.constant 1.000000e+00 : f32
    %325 = vector.broadcast %cst_67 : f32 to vector<8x32xf32>
    %326 = arith.addf %325, %324 : vector<8x32xf32>
    %327 = arith.divf %325, %326 : vector<8x32xf32>
    %328 = arith.mulf %319, %302 : vector<8x32xf32>
    %329 = arith.mulf %313, %321 : vector<8x32xf32>
    %330 = arith.addf %328, %329 : vector<8x32xf32>
    %331 = math.tanh %330 : vector<8x32xf32>
    %332 = arith.mulf %327, %331 : vector<8x32xf32>
    %333 = vector.extract_strided_slice %246 {offsets = [24, 0], sizes = [8, 128], strides = [1, 1]} : vector<64x128xf32> to vector<8x128xf32>
    %cst_68 = arith.constant dense<0.000000e+00> : vector<8x128xf32>
    %334 = tpu.matmul %332, %241, %cst_68 {dimension_numbers = #tpu.dot_dimension_numbers<[1], [0], [0], [1], [0, 0, 1, 1], [], []>} : vector<8x32xf32>, vector<32x128xf32>, vector<8x128xf32> -> vector<8x128xf32>
    %335 = arith.addf %333, %334 : vector<8x128xf32>
    %336 = vector.extract_strided_slice %335 {offsets = [0, 0], sizes = [8, 32], strides = [1, 1]} : vector<8x128xf32> to vector<8x32xf32>
    %337 = arith.negf %336 : vector<8x32xf32>
    %338 = math.exp %337 : vector<8x32xf32>
    %cst_69 = arith.constant 1.000000e+00 : f32
    %339 = vector.broadcast %cst_69 : f32 to vector<8x32xf32>
    %340 = arith.addf %339, %338 : vector<8x32xf32>
    %341 = arith.divf %339, %340 : vector<8x32xf32>
    %342 = vector.extract_strided_slice %335 {offsets = [0, 32], sizes = [8, 32], strides = [1, 1]} : vector<8x128xf32> to vector<8x32xf32>
    %343 = arith.negf %342 : vector<8x32xf32>
    %344 = math.exp %343 : vector<8x32xf32>
    %cst_70 = arith.constant 1.000000e+00 : f32
    %345 = vector.broadcast %cst_70 : f32 to vector<8x32xf32>
    %346 = arith.addf %345, %344 : vector<8x32xf32>
    %347 = arith.divf %345, %346 : vector<8x32xf32>
    %348 = vector.extract_strided_slice %335 {offsets = [0, 64], sizes = [8, 32], strides = [1, 1]} : vector<8x128xf32> to vector<8x32xf32>
    %349 = math.tanh %348 : vector<8x32xf32>
    %350 = vector.extract_strided_slice %335 {offsets = [0, 96], sizes = [8, 32], strides = [1, 1]} : vector<8x128xf32> to vector<8x32xf32>
    %351 = arith.negf %350 : vector<8x32xf32>
    %352 = math.exp %351 : vector<8x32xf32>
    %cst_71 = arith.constant 1.000000e+00 : f32
    %353 = vector.broadcast %cst_71 : f32 to vector<8x32xf32>
    %354 = arith.addf %353, %352 : vector<8x32xf32>
    %355 = arith.divf %353, %354 : vector<8x32xf32>
    %356 = arith.mulf %347, %330 : vector<8x32xf32>
    %357 = arith.mulf %341, %349 : vector<8x32xf32>
    %358 = arith.addf %356, %357 : vector<8x32xf32>
    %359 = math.tanh %358 : vector<8x32xf32>
    %360 = arith.mulf %355, %359 : vector<8x32xf32>
    %361 = vector.extract_strided_slice %246 {offsets = [32, 0], sizes = [8, 128], strides = [1, 1]} : vector<64x128xf32> to vector<8x128xf32>
    %cst_72 = arith.constant dense<0.000000e+00> : vector<8x128xf32>
    %362 = tpu.matmul %360, %241, %cst_72 {dimension_numbers = #tpu.dot_dimension_numbers<[1], [0], [0], [1], [0, 0, 1, 1], [], []>} : vector<8x32xf32>, vector<32x128xf32>, vector<8x128xf32> -> vector<8x128xf32>
    %363 = arith.addf %361, %362 : vector<8x128xf32>
    %364 = vector.extract_strided_slice %363 {offsets = [0, 0], sizes = [8, 32], strides = [1, 1]} : vector<8x128xf32> to vector<8x32xf32>
    %365 = arith.negf %364 : vector<8x32xf32>
    %366 = math.exp %365 : vector<8x32xf32>
    %cst_73 = arith.constant 1.000000e+00 : f32
    %367 = vector.broadcast %cst_73 : f32 to vector<8x32xf32>
    %368 = arith.addf %367, %366 : vector<8x32xf32>
    %369 = arith.divf %367, %368 : vector<8x32xf32>
    %370 = vector.extract_strided_slice %363 {offsets = [0, 32], sizes = [8, 32], strides = [1, 1]} : vector<8x128xf32> to vector<8x32xf32>
    %371 = arith.negf %370 : vector<8x32xf32>
    %372 = math.exp %371 : vector<8x32xf32>
    %cst_74 = arith.constant 1.000000e+00 : f32
    %373 = vector.broadcast %cst_74 : f32 to vector<8x32xf32>
    %374 = arith.addf %373, %372 : vector<8x32xf32>
    %375 = arith.divf %373, %374 : vector<8x32xf32>
    %376 = vector.extract_strided_slice %363 {offsets = [0, 64], sizes = [8, 32], strides = [1, 1]} : vector<8x128xf32> to vector<8x32xf32>
    %377 = math.tanh %376 : vector<8x32xf32>
    %378 = vector.extract_strided_slice %363 {offsets = [0, 96], sizes = [8, 32], strides = [1, 1]} : vector<8x128xf32> to vector<8x32xf32>
    %379 = arith.negf %378 : vector<8x32xf32>
    %380 = math.exp %379 : vector<8x32xf32>
    %cst_75 = arith.constant 1.000000e+00 : f32
    %381 = vector.broadcast %cst_75 : f32 to vector<8x32xf32>
    %382 = arith.addf %381, %380 : vector<8x32xf32>
    %383 = arith.divf %381, %382 : vector<8x32xf32>
    %384 = arith.mulf %375, %358 : vector<8x32xf32>
    %385 = arith.mulf %369, %377 : vector<8x32xf32>
    %386 = arith.addf %384, %385 : vector<8x32xf32>
    %387 = math.tanh %386 : vector<8x32xf32>
    %388 = arith.mulf %383, %387 : vector<8x32xf32>
    %389 = vector.extract_strided_slice %246 {offsets = [40, 0], sizes = [8, 128], strides = [1, 1]} : vector<64x128xf32> to vector<8x128xf32>
    %cst_76 = arith.constant dense<0.000000e+00> : vector<8x128xf32>
    %390 = tpu.matmul %388, %241, %cst_76 {dimension_numbers = #tpu.dot_dimension_numbers<[1], [0], [0], [1], [0, 0, 1, 1], [], []>} : vector<8x32xf32>, vector<32x128xf32>, vector<8x128xf32> -> vector<8x128xf32>
    %391 = arith.addf %389, %390 : vector<8x128xf32>
    %392 = vector.extract_strided_slice %391 {offsets = [0, 0], sizes = [8, 32], strides = [1, 1]} : vector<8x128xf32> to vector<8x32xf32>
    %393 = arith.negf %392 : vector<8x32xf32>
    %394 = math.exp %393 : vector<8x32xf32>
    %cst_77 = arith.constant 1.000000e+00 : f32
    %395 = vector.broadcast %cst_77 : f32 to vector<8x32xf32>
    %396 = arith.addf %395, %394 : vector<8x32xf32>
    %397 = arith.divf %395, %396 : vector<8x32xf32>
    %398 = vector.extract_strided_slice %391 {offsets = [0, 32], sizes = [8, 32], strides = [1, 1]} : vector<8x128xf32> to vector<8x32xf32>
    %399 = arith.negf %398 : vector<8x32xf32>
    %400 = math.exp %399 : vector<8x32xf32>
    %cst_78 = arith.constant 1.000000e+00 : f32
    %401 = vector.broadcast %cst_78 : f32 to vector<8x32xf32>
    %402 = arith.addf %401, %400 : vector<8x32xf32>
    %403 = arith.divf %401, %402 : vector<8x32xf32>
    %404 = vector.extract_strided_slice %391 {offsets = [0, 64], sizes = [8, 32], strides = [1, 1]} : vector<8x128xf32> to vector<8x32xf32>
    %405 = math.tanh %404 : vector<8x32xf32>
    %406 = vector.extract_strided_slice %391 {offsets = [0, 96], sizes = [8, 32], strides = [1, 1]} : vector<8x128xf32> to vector<8x32xf32>
    %407 = arith.negf %406 : vector<8x32xf32>
    %408 = math.exp %407 : vector<8x32xf32>
    %cst_79 = arith.constant 1.000000e+00 : f32
    %409 = vector.broadcast %cst_79 : f32 to vector<8x32xf32>
    %410 = arith.addf %409, %408 : vector<8x32xf32>
    %411 = arith.divf %409, %410 : vector<8x32xf32>
    %412 = arith.mulf %403, %386 : vector<8x32xf32>
    %413 = arith.mulf %397, %405 : vector<8x32xf32>
    %414 = arith.addf %412, %413 : vector<8x32xf32>
    %415 = math.tanh %414 : vector<8x32xf32>
    %416 = arith.mulf %411, %415 : vector<8x32xf32>
    %417 = vector.extract_strided_slice %246 {offsets = [48, 0], sizes = [8, 128], strides = [1, 1]} : vector<64x128xf32> to vector<8x128xf32>
    %cst_80 = arith.constant dense<0.000000e+00> : vector<8x128xf32>
    %418 = tpu.matmul %416, %241, %cst_80 {dimension_numbers = #tpu.dot_dimension_numbers<[1], [0], [0], [1], [0, 0, 1, 1], [], []>} : vector<8x32xf32>, vector<32x128xf32>, vector<8x128xf32> -> vector<8x128xf32>
    %419 = arith.addf %417, %418 : vector<8x128xf32>
    %420 = vector.extract_strided_slice %419 {offsets = [0, 0], sizes = [8, 32], strides = [1, 1]} : vector<8x128xf32> to vector<8x32xf32>
    %421 = arith.negf %420 : vector<8x32xf32>
    %422 = math.exp %421 : vector<8x32xf32>
    %cst_81 = arith.constant 1.000000e+00 : f32
    %423 = vector.broadcast %cst_81 : f32 to vector<8x32xf32>
    %424 = arith.addf %423, %422 : vector<8x32xf32>
    %425 = arith.divf %423, %424 : vector<8x32xf32>
    %426 = vector.extract_strided_slice %419 {offsets = [0, 32], sizes = [8, 32], strides = [1, 1]} : vector<8x128xf32> to vector<8x32xf32>
    %427 = arith.negf %426 : vector<8x32xf32>
    %428 = math.exp %427 : vector<8x32xf32>
    %cst_82 = arith.constant 1.000000e+00 : f32
    %429 = vector.broadcast %cst_82 : f32 to vector<8x32xf32>
    %430 = arith.addf %429, %428 : vector<8x32xf32>
    %431 = arith.divf %429, %430 : vector<8x32xf32>
    %432 = vector.extract_strided_slice %419 {offsets = [0, 64], sizes = [8, 32], strides = [1, 1]} : vector<8x128xf32> to vector<8x32xf32>
    %433 = math.tanh %432 : vector<8x32xf32>
    %434 = vector.extract_strided_slice %419 {offsets = [0, 96], sizes = [8, 32], strides = [1, 1]} : vector<8x128xf32> to vector<8x32xf32>
    %435 = arith.negf %434 : vector<8x32xf32>
    %436 = math.exp %435 : vector<8x32xf32>
    %cst_83 = arith.constant 1.000000e+00 : f32
    %437 = vector.broadcast %cst_83 : f32 to vector<8x32xf32>
    %438 = arith.addf %437, %436 : vector<8x32xf32>
    %439 = arith.divf %437, %438 : vector<8x32xf32>
    %440 = arith.mulf %431, %414 : vector<8x32xf32>
    %441 = arith.mulf %425, %433 : vector<8x32xf32>
    %442 = arith.addf %440, %441 : vector<8x32xf32>
    %443 = math.tanh %442 : vector<8x32xf32>
    %444 = arith.mulf %439, %443 : vector<8x32xf32>
    %445 = vector.extract_strided_slice %246 {offsets = [56, 0], sizes = [8, 128], strides = [1, 1]} : vector<64x128xf32> to vector<8x128xf32>
    %cst_84 = arith.constant dense<0.000000e+00> : vector<8x128xf32>
    %446 = tpu.matmul %444, %241, %cst_84 {dimension_numbers = #tpu.dot_dimension_numbers<[1], [0], [0], [1], [0, 0, 1, 1], [], []>} : vector<8x32xf32>, vector<32x128xf32>, vector<8x128xf32> -> vector<8x128xf32>
    %447 = arith.addf %445, %446 : vector<8x128xf32>
    %448 = vector.extract_strided_slice %447 {offsets = [0, 0], sizes = [8, 32], strides = [1, 1]} : vector<8x128xf32> to vector<8x32xf32>
    %449 = arith.negf %448 : vector<8x32xf32>
    %450 = math.exp %449 : vector<8x32xf32>
    %cst_85 = arith.constant 1.000000e+00 : f32
    %451 = vector.broadcast %cst_85 : f32 to vector<8x32xf32>
    %452 = arith.addf %451, %450 : vector<8x32xf32>
    %453 = arith.divf %451, %452 : vector<8x32xf32>
    %454 = vector.extract_strided_slice %447 {offsets = [0, 32], sizes = [8, 32], strides = [1, 1]} : vector<8x128xf32> to vector<8x32xf32>
    %455 = arith.negf %454 : vector<8x32xf32>
    %456 = math.exp %455 : vector<8x32xf32>
    %cst_86 = arith.constant 1.000000e+00 : f32
    %457 = vector.broadcast %cst_86 : f32 to vector<8x32xf32>
    %458 = arith.addf %457, %456 : vector<8x32xf32>
    %459 = arith.divf %457, %458 : vector<8x32xf32>
    %460 = vector.extract_strided_slice %447 {offsets = [0, 64], sizes = [8, 32], strides = [1, 1]} : vector<8x128xf32> to vector<8x32xf32>
    %461 = math.tanh %460 : vector<8x32xf32>
    %462 = vector.extract_strided_slice %447 {offsets = [0, 96], sizes = [8, 32], strides = [1, 1]} : vector<8x128xf32> to vector<8x32xf32>
    %463 = arith.negf %462 : vector<8x32xf32>
    %464 = math.exp %463 : vector<8x32xf32>
    %cst_87 = arith.constant 1.000000e+00 : f32
    %465 = vector.broadcast %cst_87 : f32 to vector<8x32xf32>
    %466 = arith.addf %465, %464 : vector<8x32xf32>
    %467 = arith.divf %465, %466 : vector<8x32xf32>
    %468 = arith.mulf %459, %442 : vector<8x32xf32>
    %469 = arith.mulf %453, %461 : vector<8x32xf32>
    %470 = arith.addf %468, %469 : vector<8x32xf32>
    %471 = math.tanh %470 : vector<8x32xf32>
    %472 = arith.mulf %467, %471 : vector<8x32xf32>
    %cst_88 = arith.constant 0.000000e+00 : f32
    %473 = vector.broadcast %cst_88 : f32 to vector<8x32xf32>
    %474 = arith.cmpf ogt, %472, %473 : vector<8x32xf32>
    %cst_89 = arith.constant 0.00999999977 : f32
    %475 = vector.broadcast %cst_89 : f32 to vector<8x32xf32>
    %476 = arith.mulf %475, %472 : vector<8x32xf32>
    %477 = arith.select %474, %472, %476 : vector<8x32xi1>, vector<8x32xf32>
    %c0_90 = arith.constant 0 : index
    %c0_91 = arith.constant 0 : index
    %478 = vector.load %arg5[%c0_90, %c0_91] : memref<32x32xf32, #tpu.memory_space<vmem>>, vector<32x32xf32>
    %cst_92 = arith.constant dense<0.000000e+00> : vector<8x32xf32>
    %479 = tpu.matmul %477, %478, %cst_92 {dimension_numbers = #tpu.dot_dimension_numbers<[1], [0], [0], [1], [0, 0, 1, 1], [], []>} : vector<8x32xf32>, vector<32x32xf32>, vector<8x32xf32> -> vector<8x32xf32>
    %c0_93 = arith.constant 0 : index
    %c0_94 = arith.constant 0 : index
    %480 = vector.load %arg6[%c0_93, %c0_94] : memref<1x32xf32, #tpu.memory_space<vmem>>, vector<1x32xf32>
    %481 = vector.broadcast %480 : vector<1x32xf32> to vector<8x32xf32>
    %482 = arith.addf %479, %481 : vector<8x32xf32>
    %cst_95 = arith.constant 0.000000e+00 : f32
    %483 = vector.broadcast %cst_95 : f32 to vector<8x32xf32>
    %484 = arith.cmpf ogt, %482, %483 : vector<8x32xf32>
    %cst_96 = arith.constant 0.00999999977 : f32
    %485 = vector.broadcast %cst_96 : f32 to vector<8x32xf32>
    %486 = arith.mulf %485, %482 : vector<8x32xf32>
    %487 = arith.select %484, %482, %486 : vector<8x32xi1>, vector<8x32xf32>
    %c0_97 = arith.constant 0 : index
    %c0_98 = arith.constant 0 : index
    %488 = vector.load %arg7[%c0_97, %c0_98] : memref<32x16xf32, #tpu.memory_space<vmem>>, vector<32x16xf32>
    %cst_99 = arith.constant dense<0.000000e+00> : vector<8x16xf32>
    %489 = tpu.matmul %487, %488, %cst_99 {dimension_numbers = #tpu.dot_dimension_numbers<[1], [0], [0], [1], [0, 0, 1, 1], [], []>} : vector<8x32xf32>, vector<32x16xf32>, vector<8x16xf32> -> vector<8x16xf32>
    %c0_100 = arith.constant 0 : index
    %c0_101 = arith.constant 0 : index
    %490 = vector.load %arg8[%c0_100, %c0_101] : memref<1x16xf32, #tpu.memory_space<vmem>>, vector<1x16xf32>
    %491 = vector.broadcast %490 : vector<1x16xf32> to vector<8x16xf32>
    %492 = arith.addf %489, %491 : vector<8x16xf32>
    %cst_102 = arith.constant 0.000000e+00 : f32
    %493 = vector.broadcast %cst_102 : f32 to vector<8x16xf32>
    %494 = arith.cmpf ogt, %492, %493 : vector<8x16xf32>
    %cst_103 = arith.constant 0.00999999977 : f32
    %495 = vector.broadcast %cst_103 : f32 to vector<8x16xf32>
    %496 = arith.mulf %495, %492 : vector<8x16xf32>
    %497 = arith.select %494, %492, %496 : vector<8x16xi1>, vector<8x16xf32>
    %c0_104 = arith.constant 0 : index
    %c0_105 = arith.constant 0 : index
    %498 = vector.load %arg9[%c0_104, %c0_105] : memref<16x128xf32, #tpu.memory_space<vmem>>, vector<16x128xf32>
    %cst_106 = arith.constant dense<0.000000e+00> : vector<8x128xf32>
    %499 = tpu.matmul %497, %498, %cst_106 {dimension_numbers = #tpu.dot_dimension_numbers<[1], [0], [0], [1], [0, 0, 1, 1], [], []>} : vector<8x16xf32>, vector<16x128xf32>, vector<8x128xf32> -> vector<8x128xf32>
    %c0_107 = arith.constant 0 : index
    %c0_108 = arith.constant 0 : index
    %500 = vector.load %arg10[%c0_107, %c0_108] : memref<1x128xf32, #tpu.memory_space<vmem>>, vector<1x128xf32>
    %501 = vector.broadcast %500 : vector<1x128xf32> to vector<8x128xf32>
    %502 = arith.addf %499, %501 : vector<8x128xf32>
    %c0_109 = arith.constant 0 : index
    %c0_110 = arith.constant 0 : index
    %503 = vector.load %arg11[%c0_109, %c0_110] : memref<8x128xf32, #tpu.memory_space<vmem>>, vector<8x128xf32>
    tpu.vector_store %arg11[%c0_109, %c0_110], %502 {strides = array<i32>} : memref<8x128xf32, #tpu.memory_space<vmem>>, vector<8x128xf32>,
    return
  }
  func.func @transform_0(%arg0: i32) -> (i32, i32, i32) {
    %c0_i32 = arith.constant 0 : i32
    %c0_i32_0 = arith.constant 0 : i32
    %c0_i32_1 = arith.constant 0 : i32
    return %c0_i32, %arg0, %c0_i32_0 : i32, i32, i32
  }
  func.func @transform_1(%arg0: i32) -> (i32, i32, i32) {
    %c0_i32 = arith.constant 0 : i32
    %c0_i32_0 = arith.constant 0 : i32
    %c0_i32_1 = arith.constant 0 : i32
    %c0_i32_2 = arith.constant 0 : i32
    return %c0_i32, %c0_i32_0, %c0_i32_1 : i32, i32, i32
  }
  func.func @transform_2(%arg0: i32) -> (i32, i32, i32) {
    %c0_i32 = arith.constant 0 : i32
    %c0_i32_0 = arith.constant 0 : i32
    %c0_i32_1 = arith.constant 0 : i32
    %c0_i32_2 = arith.constant 0 : i32
    return %c0_i32, %c0_i32_0, %c0_i32_1 : i32, i32, i32
  }
  func.func @transform_3(%arg0: i32) -> (i32, i32, i32) {
    %c0_i32 = arith.constant 0 : i32
    %c0_i32_0 = arith.constant 0 : i32
    %c0_i32_1 = arith.constant 0 : i32
    %c0_i32_2 = arith.constant 0 : i32
    return %c0_i32, %c0_i32_0, %c0_i32_1 : i32, i32, i32
  }
  func.func @transform_4(%arg0: i32) -> (i32, i32) {
    %c0_i32 = arith.constant 0 : i32
    %c0_i32_0 = arith.constant 0 : i32
    %c0_i32_1 = arith.constant 0 : i32
    return %c0_i32, %c0_i32_0 : i32, i32
  }
  func.func @transform_5(%arg0: i32) -> (i32, i32) {
    %c0_i32 = arith.constant 0 : i32
    %c0_i32_0 = arith.constant 0 : i32
    %c0_i32_1 = arith.constant 0 : i32
    return %c0_i32, %c0_i32_0 : i32, i32
  }
  func.func @transform_6(%arg0: i32) -> (i32, i32) {
    %c0_i32 = arith.constant 0 : i32
    %c0_i32_0 = arith.constant 0 : i32
    %c0_i32_1 = arith.constant 0 : i32
    return %c0_i32, %c0_i32_0 : i32, i32
  }
  func.func @transform_7(%arg0: i32) -> (i32, i32) {
    %c0_i32 = arith.constant 0 : i32
    %c0_i32_0 = arith.constant 0 : i32
    %c0_i32_1 = arith.constant 0 : i32
    return %c0_i32, %c0_i32_0 : i32, i32
  }
  func.func @transform_8(%arg0: i32) -> (i32, i32) {
    %c0_i32 = arith.constant 0 : i32
    %c0_i32_0 = arith.constant 0 : i32
    %c0_i32_1 = arith.constant 0 : i32
    return %c0_i32, %c0_i32_0 : i32, i32
  }
  func.func @transform_9(%arg0: i32) -> (i32, i32) {
    %c0_i32 = arith.constant 0 : i32
    %c0_i32_0 = arith.constant 0 : i32
    %c0_i32_1 = arith.constant 0 : i32
    return %c0_i32, %c0_i32_0 : i32, i32
  }
  func.func @transform_10(%arg0: i32) -> (i32, i32) {
    %c0_i32 = arith.constant 0 : i32
    %c0_i32_0 = arith.constant 0 : i32
    return %arg0, %c0_i32 : i32, i32
  }
}

</mosaic_0001>

<llo_original>
// kernel: tpu_custom_call.1
$region0: #{tpu_custom_call.1}
  #allocation0 [shape = 'u32[]', space=smem, size = 0x4, offset = 0x4, fixed_abs, tag = 'smem constant byte address 0x4 - core index']
  #allocation1 [shape = 'u32[144,128]{1,0:T(1,128)}', space=vmem, size = 0x12000, scoped, tag = 'internal scratch']
  %s0 = inlined_call_operand.hbm [shape: f32[8,8,32], index: 0, kind: input, shape index: {}]
  %s1 = inlined_call_operand.hbm [shape: f32[2,32,128], index: 1, kind: input, shape index: {}]
  %s2 = inlined_call_operand.hbm [shape: f32[2,32,128], index: 2, kind: input, shape index: {}]
  %s3 = inlined_call_operand.vmem [shape: f32[2,1,128], index: 3, kind: input, shape index: {}]
  %s4 = inlined_call_operand.vmem [shape: f32[32,32], index: 4, kind: input, shape index: {}]
  %s5 = inlined_call_operand.vmem [shape: f32[1,32], index: 5, kind: input, shape index: {}]
  %s6 = inlined_call_operand.vmem [shape: f32[32,16], index: 6, kind: input, shape index: {}]
  %s7 = inlined_call_operand.vmem [shape: f32[1,16], index: 7, kind: input, shape index: {}]
  %s8 = inlined_call_operand.vmem [shape: f32[16,128], index: 8, kind: input, shape index: {}]
  %s9 = inlined_call_operand.vmem [shape: f32[1,128], index: 9, kind: input, shape index: {}]
  %s10 = inlined_call_operand.hbm [shape: f32[8,128], index: 10, kind: output, shape index: {}]
  %s11 = sld [smem:[#allocation0]]
  $region62: #{tpu_custom_call.1} parent=0
    _
  %s13 = ssub.s32 1, %s11
  %s14 = scalar_select 0, %s13, %s11
  $region1: #{tpu_custom_call.1} parent=0
    #allocation2 [shape = 'u8[32768]{0}', space=vmem, size = 0x8000, scoped, tag = 'input window, operand 0, single buffered']
    #allocation3 [shape = 's32[1]{0}', space=sflag, size = 0x4, scoped, tag = 'scoped memory for tpu_custom_call.1']
    #allocation4 [shape = 's32[1]{0}', space=sflag, size = 0x4, scoped, tag = 'scoped memory for tpu_custom_call.1']
    #allocation5 [shape = 'u8[32768]{0}', space=vmem, size = 0x8000, scoped, tag = 'input window, operand 1, single buffered']
    #allocation6 [shape = 's32[1]{0}', space=sflag, size = 0x4, scoped, tag = 'scoped memory for tpu_custom_call.1']
    #allocation7 [shape = 'u8[32768]{0}', space=vmem, size = 0x8000, scoped, tag = 'input window, operand 2, single buffered']
    #allocation8 [shape = 'u8[4096]{0}', space=vmem, size = 0x1000, scoped, tag = 'output window, operand 0, single buffered']
    %15 = vsyncpa [#allocation3], 0
    %16 = vsyncpa [#allocation6], 0
    %17 = vsyncpa [#allocation4], 0
    // Predicated region
    $region2: #{tpu_custom_call.1} parent=1 // pred_check
      _
    $region3: #{tpu_custom_call.1} parent=1 // pred_check_branch
      %19 = sbr.rel (0) target = $region5
    $region4: #{tpu_custom_call.1} parent=1 // pred_region
      %s21 = ssub.s32 1024, 1024
      %22 = vsyncadd [#allocation3], %s21
      %s23 = sshll.u32 [#allocation2], 4
      %s24 = int_to_ptr.vmem [resolvable:$true] %s23
      %29 = dma.hbm_to_vmem [thread:$0]  %s0, 1024, %s24, [#allocation3], 128, 128, 8
    $region5: #{tpu_custom_call.1} parent=1 // pred_fallthru
      _
    // Predicated region
    $region6: #{tpu_custom_call.1} parent=1 // pred_check
      _
    $region7: #{tpu_custom_call.1} parent=1 // pred_check_branch
      %31 = sbr.rel (0) target = $region9
    $region8: #{tpu_custom_call.1} parent=1 // pred_region
      %s33 = ssub.s32 1024, 1024
      %34 = vsyncadd [#allocation6], %s33
      %s35 = sshll.u32 [#allocation5], 4
      %s36 = int_to_ptr.vmem [resolvable:$true] %s35
      %41 = dma.hbm_to_vmem [thread:$0]  %s1, 1024, %s36, [#allocation6], 128, 128, 8
    $region9: #{tpu_custom_call.1} parent=1 // pred_fallthru
      _
    // Predicated region
    $region10: #{tpu_custom_call.1} parent=1 // pred_check
      _
    $region11: #{tpu_custom_call.1} parent=1 // pred_check_branch
      %43 = sbr.rel (0) target = $region13
    $region12: #{tpu_custom_call.1} parent=1 // pred_region
      %s45 = ssub.s32 1024, 1024
      %46 = vsyncadd [#allocation6], %s45
      %s47 = sshll.u32 [#allocation7], 4
      %s48 = int_to_ptr.vmem [resolvable:$true] %s47
      %53 = dma.hbm_to_vmem [thread:$0]  %s2, 1024, %s48, [#allocation6], 128, 128, 8
    $region13: #{tpu_custom_call.1} parent=1 // pred_fallthru
      _
    // Predicated region
    $region14: #{tpu_custom_call.1} parent=1 // pred_check
      _
    $region15: #{tpu_custom_call.1} parent=1 // pred_check_branch
      %55 = sbr.rel (0) target = $region17
    $region16: #{tpu_custom_call.1} parent=1 // pred_region
      _
    $region17: #{tpu_custom_call.1} parent=1 // pred_fallthru
      _
    // Predicated region
    $region18: #{tpu_custom_call.1} parent=1 // pred_check
      _
    $region19: #{tpu_custom_call.1} parent=1 // pred_check_branch
      %57 = sbr.rel (0) target = $region21
    $region20: #{tpu_custom_call.1} parent=1 // pred_region
      _
    $region21: #{tpu_custom_call.1} parent=1 // pred_fallthru
      _
    // Predicated region
    $region22: #{tpu_custom_call.1} parent=1 // pred_check
      _
    $region23: #{tpu_custom_call.1} parent=1 // pred_check_branch
      %59 = sbr.rel (0) target = $region25
    $region24: #{tpu_custom_call.1} parent=1 // pred_region
      _
    $region25: #{tpu_custom_call.1} parent=1 // pred_fallthru
      _
    // Predicated region
    $region26: #{tpu_custom_call.1} parent=1 // pred_check
      _
    $region27: #{tpu_custom_call.1} parent=1 // pred_check_branch
      %61 = sbr.rel (0) target = $region29
    $region28: #{tpu_custom_call.1} parent=1 // pred_region
      _
    $region29: #{tpu_custom_call.1} parent=1 // pred_fallthru
      _
    // Predicated region
    $region30: #{tpu_custom_call.1} parent=1 // pred_check
      _
    $region31: #{tpu_custom_call.1} parent=1 // pred_check_branch
      %63 = sbr.rel (0) target = $region33
    $region32: #{tpu_custom_call.1} parent=1 // pred_region
      _
    $region33: #{tpu_custom_call.1} parent=1 // pred_fallthru
      _
    // Predicated region
    $region34: #{tpu_custom_call.1} parent=1 // pred_check
      _
    $region35: #{tpu_custom_call.1} parent=1 // pred_check_branch
      %65 = sbr.rel (0) target = $region37
    $region36: #{tpu_custom_call.1} parent=1 // pred_region
      _
    $region37: #{tpu_custom_call.1} parent=1 // pred_fallthru
      _
    // Predicated region
    $region38: #{tpu_custom_call.1} parent=1 // pred_check
      _
    $region39: #{tpu_custom_call.1} parent=1 // pred_check_branch
      %67 = sbr.rel (0) target = $region41
    $region40: #{tpu_custom_call.1} parent=1 // pred_region
      _
    $region41: #{tpu_custom_call.1} parent=1 // pred_fallthru
      _
    // Predicated region
    $region42: #{tpu_custom_call.1} parent=1 // pred_check
      _
    $region43: #{tpu_custom_call.1} parent=1 // pred_check_branch
      %69 = sbr.rel (0) target = $region45
    $region44: #{tpu_custom_call.1} parent=1 // pred_region
      %70 = dma.done [#allocation3], 1024
    $region45: #{tpu_custom_call.1} parent=1 // pred_fallthru
      _
    // Predicated region
    $region46: #{tpu_custom_call.1} parent=1 // pred_check
      _
    $region47: #{tpu_custom_call.1} parent=1 // pred_check_branch
      %72 = sbr.rel (0) target = $region49
    $region48: #{tpu_custom_call.1} parent=1 // pred_region
      %73 = dma.done [#allocation6], 1024
    $region49: #{tpu_custom_call.1} parent=1 // pred_fallthru
      _
    // Predicated region
    $region50: #{tpu_custom_call.1} parent=1 // pred_check
      _
    $region51: #{tpu_custom_call.1} parent=1 // pred_check_branch
      %75 = sbr.rel (0) target = $region53
    $region52: #{tpu_custom_call.1} parent=1 // pred_region
      %76 = dma.done [#allocation6], 1024
    $region53: #{tpu_custom_call.1} parent=1 // pred_fallthru
      _
    %v77 = vld [vmem:[#allocation2] sm:$0xff]
    %v78 = vld [vmem:[#allocation2 + $0x8] sm:$0xff]
    %v79 = vld [vmem:[#allocation2 + $0x10] sm:$0xff]
    %v80 = vld [vmem:[#allocation2 + $0x18] sm:$0xff]
    %v81 = vld [vmem:[#allocation2 + $0x20] sm:$0xff]
    %v82 = vld [vmem:[#allocation2 + $0x28] sm:$0xff]
    %v83 = vld [vmem:[#allocation2 + $0x30] sm:$0xff]
    %v84 = vld [vmem:[#allocation2 + $0x38] sm:$0xff]
    %v85 = vld [vmem:[#allocation5] sm:$0xff]
    %v86 = vld [vmem:[#allocation5 + $0x8] sm:$0xff]
    %v87 = vld [vmem:[#allocation5 + $0x10] sm:$0xff]
    %v88 = vld [vmem:[#allocation5 + $0x18] sm:$0xff]
    %v89 = vld [vmem:[#allocation7] sm:$0xff]
    %v90 = vld [vmem:[#allocation7 + $0x8] sm:$0xff]
    %v91 = vld [vmem:[#allocation7 + $0x10] sm:$0xff]
    %v92 = vld [vmem:[#allocation7 + $0x18] sm:$0xff]
    %v93 = vld [vmem:[%s3] sm:$0x1]
    %v95 = vlaneseq
    %v96 = vshrl.u32 %v95, 7
    %v97 = vsub.s32 0, %v96
    %v98 = vrot.slane %v93, %v97
    %vm100 = vcmask 261120
    %v102 = vsel %vm100, %v77, 0
    %v105 = vsel %vm100, %v78, 0
    %v108 = vsel %vm100, %v79, 0
    %v111 = vsel %vm100, %v80, 0
    %v114 = vsel %vm100, %v81, 0
    %v117 = vsel %vm100, %v82, 0
    %v120 = vsel %vm100, %v83, 0
    %v123 = vsel %vm100, %v84, 0
    %125 = vmatprep.subr.mxu0 0.0
    %126 = vmatpush1.msra.mxu0 %v85
    %127 = vmatprep.subr.mxu0 0.0
    %128 = vmatpush1.msra.mxu0 %v86
    %129 = vmatprep.subr.mxu0 0.0
    %130 = vmatpush1.msra.mxu0 %v87
    %131 = vmatprep.subr.mxu0 0.0
    %132 = vmatpush1.msra.mxu0 %v88
    %133 = vmatprep.subr.mxu0 0.0
    %134 = vmatpush1.msra.mxu0 0.0
    %135 = vmatprep.subr.mxu0 0.0
    %136 = vmatpush1.msra.mxu0 0.0
    %137 = vmatprep.subr.mxu0 0.0
    %138 = vmatpush1.msra.mxu0 0.0
    %139 = vmatprep.subr.mxu0 0.0
    %140 = vmatpush1.msra.mxu0 0.0
    %141 = vmatprep.subr.mxu0 0.0
    %142 = vmatpush1.msra.mxu0 0.0
    %143 = vmatprep.subr.mxu0 0.0
    %144 = vmatpush1.msra.mxu0 0.0
    %145 = vmatprep.subr.mxu0 0.0
    %146 = vmatpush1.msra.mxu0 0.0
    %147 = vmatprep.subr.mxu0 0.0
    %148 = vmatpush1.msra.mxu0 0.0
    %149 = vmatprep.subr.mxu0 0.0
    %150 = vmatpush1.msra.mxu0 0.0
    %151 = vmatprep.subr.mxu0 0.0
    %152 = vmatpush1.msra.mxu0 0.0
    %153 = vmatprep.subr.mxu0 0.0
    %154 = vmatpush1.msra.mxu0 0.0
    %155 = vmatprep.subr.mxu0 0.0
    %156 = vmatpush1.msra.mxu0 0.0
    %157 = vmatprep.subr.mxu0 0.0
    %158 = vmatpush1.msra.mxu0 0.0
    %159 = vmatprep.subr.mxu0 0.0
    %160 = vmatpush1.msra.mxu0 0.0
    %161 = vmatprep.subr.mxu0 0.0
    %162 = vmatpush1.msra.mxu0 0.0
    %163 = vmatprep.subr.mxu0 0.0
    %164 = vmatpush1.msra.mxu0 0.0
    %165 = vmatprep.subr.mxu0 0.0
    %166 = vmatpush1.msra.mxu0 0.0
    %167 = vmatprep.subr.mxu0 0.0
    %168 = vmatpush1.msra.mxu0 0.0
    %169 = vmatprep.subr.mxu0 0.0
    %170 = vmatpush1.msra.mxu0 0.0
    %171 = vmatprep.subr.mxu0 0.0
    %172 = vmatpush1.msra.mxu0 0.0
    %173 = vmatprep.subr.mxu0 0.0
    %174 = vmatpush1.msra.mxu0 0.0
    %175 = vmatprep.subr.mxu0 0.0
    %176 = vmatpush1.msra.mxu0 0.0
    %177 = vmatprep.subr.mxu0 0.0
    %178 = vmatpush1.msra.mxu0 0.0
    %179 = vmatprep.subr.mxu0 0.0
    %180 = vmatpush1.msra.mxu0 0.0
    %181 = vmatprep.subr.mxu0 0.0
    %182 = vmatpush1.msra.mxu0 0.0
    %183 = vmatprep.subr.mxu0 0.0
    %184 = vmatpush1.msra.mxu0 0.0
    %185 = vmatprep.subr.mxu0 0.0
    %186 = vmatpush1.msra.mxu0 0.0
    %187 = vmatprep.subr.mxu0 0.0
    %188 = vmatpush1.msra.mxu0 0.0
    %189 = vmatprep.mubr.f32.mxu0 0.0
    %190 = vmatmul.mubr.f32.gmra.mrb[0].mxu0 %v102
    %v191 = vpop.f32.mrb[0].mxu0
    %v192 = vadd.f32 %v98, %v191
    %v193 = vpop.f32.mrb[0].mxu0
    %194 = vmatprep.mubr.f32.mxu0 0.0
    %195 = vmatmul.mubr.f32.gmra.mrb[0].mxu0 %v105
    %v196 = vpop.f32.mrb[0].mxu0
    %v197 = vadd.f32 %v98, %v196
    %v198 = vpop.f32.mrb[0].mxu0
    %199 = vmatprep.mubr.f32.mxu0 0.0
    %200 = vmatmul.mubr.f32.gmra.mrb[0].mxu0 %v108
    %v201 = vpop.f32.mrb[0].mxu0
    %v202 = vadd.f32 %v98, %v201
    %v203 = vpop.f32.mrb[0].mxu0
    %204 = vmatprep.mubr.f32.mxu0 0.0
    %205 = vmatmul.mubr.f32.gmra.mrb[0].mxu0 %v111
    %v206 = vpop.f32.mrb[0].mxu0
    %v207 = vadd.f32 %v98, %v206
    %v208 = vpop.f32.mrb[0].mxu0
    %209 = vmatprep.mubr.f32.mxu0 0.0
    %210 = vmatmul.mubr.f32.gmra.mrb[0].mxu0 %v114
    %v211 = vpop.f32.mrb[0].mxu0
    %v212 = vadd.f32 %v98, %v211
    %v213 = vpop.f32.mrb[0].mxu0
    %214 = vmatprep.mubr.f32.mxu0 0.0
    %215 = vmatmul.mubr.f32.gmra.mrb[0].mxu0 %v117
    %v216 = vpop.f32.mrb[0].mxu0
    %v217 = vadd.f32 %v98, %v216
    %v218 = vpop.f32.mrb[0].mxu0
    %219 = vmatprep.mubr.f32.mxu0 0.0
    %220 = vmatmul.mubr.f32.gmra.mrb[0].mxu0 %v120
    %v221 = vpop.f32.mrb[0].mxu0
    %v222 = vadd.f32 %v98, %v221
    %v223 = vpop.f32.mrb[0].mxu0
    %224 = vmatprep.mubr.f32.mxu0 0.0
    %225 = vmatmul.mubr.f32.gmra.mrb[0].mxu0 %v123
    %v226 = vpop.f32.mrb[0].mxu0
    %v227 = vadd.f32 %v98, %v226
    %v228 = vpop.f32.mrb[0].mxu0
    %229 = vdwg.mxu0
    %v231 = vsel %vm100, 0.0, 0
    %233 = vmatprep.subr.mxu0 0.0
    %234 = vmatpush1.msra.mxu0 %v89
    %235 = vmatprep.subr.mxu0 0.0
    %236 = vmatpush1.msra.mxu0 %v90
    %237 = vmatprep.subr.mxu0 0.0
    %238 = vmatpush1.msra.mxu0 %v91
    %239 = vmatprep.subr.mxu0 0.0
    %240 = vmatpush1.msra.mxu0 %v92
    %241 = vmatprep.subr.mxu0 0.0
    %242 = vmatpush1.msra.mxu0 0.0
    %243 = vmatprep.subr.mxu0 0.0
    %244 = vmatpush1.msra.mxu0 0.0
    %245 = vmatprep.subr.mxu0 0.0
    %246 = vmatpush1.msra.mxu0 0.0
    %247 = vmatprep.subr.mxu0 0.0
    %248 = vmatpush1.msra.mxu0 0.0
    %249 = vmatprep.subr.mxu0 0.0
    %250 = vmatpush1.msra.mxu0 0.0
    %251 = vmatprep.subr.mxu0 0.0
    %252 = vmatpush1.msra.mxu0 0.0
    %253 = vmatprep.subr.mxu0 0.0
    %254 = vmatpush1.msra.mxu0 0.0
    %255 = vmatprep.subr.mxu0 0.0
    %256 = vmatpush1.msra.mxu0 0.0
    %257 = vmatprep.subr.mxu0 0.0
    %258 = vmatpush1.msra.mxu0 0.0
    %259 = vmatprep.subr.mxu0 0.0
    %260 = vmatpush1.msra.mxu0 0.0
    %261 = vmatprep.subr.mxu0 0.0
    %262 = vmatpush1.msra.mxu0 0.0
    %263 = vmatprep.subr.mxu0 0.0
    %264 = vmatpush1.msra.mxu0 0.0
    %265 = vmatprep.subr.mxu0 0.0
    %266 = vmatpush1.msra.mxu0 0.0
    %267 = vmatprep.subr.mxu0 0.0
    %268 = vmatpush1.msra.mxu0 0.0
    %269 = vmatprep.subr.mxu0 0.0
    %270 = vmatpush1.msra.mxu0 0.0
    %271 = vmatprep.subr.mxu0 0.0
    %272 = vmatpush1.msra.mxu0 0.0
    %273 = vmatprep.subr.mxu0 0.0
    %274 = vmatpush1.msra.mxu0 0.0
    %275 = vmatprep.subr.mxu0 0.0
    %276 = vmatpush1.msra.mxu0 0.0
    %277 = vmatprep.subr.mxu0 0.0
    %278 = vmatpush1.msra.mxu0 0.0
    %279 = vmatprep.subr.mxu0 0.0
    %280 = vmatpush1.msra.mxu0 0.0
    %281 = vmatprep.subr.mxu0 0.0
    %282 = vmatpush1.msra.mxu0 0.0
    %283 = vmatprep.subr.mxu0 0.0
    %284 = vmatpush1.msra.mxu0 0.0
    %285 = vmatprep.subr.mxu0 0.0
    %286 = vmatpush1.msra.mxu0 0.0
    %287 = vmatprep.subr.mxu0 0.0
    %288 = vmatpush1.msra.mxu0 0.0
    %289 = vmatprep.subr.mxu0 0.0
    %290 = vmatpush1.msra.mxu0 0.0
    %291 = vmatprep.subr.mxu0 0.0
    %292 = vmatpush1.msra.mxu0 0.0
    %293 = vmatprep.subr.mxu0 0.0
    %294 = vmatpush1.msra.mxu0 0.0
    %295 = vmatprep.subr.mxu0 0.0
    %296 = vmatpush1.msra.mxu0 0.0
    %297 = vmatprep.mubr.f32.mxu0 0.0
    %298 = vmatmul.mubr.f32.gmra.mrb[0].mxu0 %v231
    %v299 = vpop.f32.mrb[0].mxu0
    %v300 = vadd.f32 0.0, %v299
    %v301 = vpop.f32.mrb[0].mxu0
    %302 = vdwg.mxu0
    %v303 = vadd.f32 %v192, %v300
    %v304 = vxor.u32 %v303, 2147483648
    %v305 = vmul.f32 %v304, 1.442695
    %v306 = vpow.pop %v305
    %v307 = vadd.f32 %v306, 1.0
    %v308 = vrcp.pop %v307
    %v309 = vmul.f32 1.0, %v308
    %v310 = vtanh.pop %v303
    %v311 = vmul.f32 %v309, 0.0
    %313 = vrot.lane.b32.xlu0 %v310, 64
    %v314 = vpop.permute.xlu0 %313
    %v316 = vmul.f32 %v309, %v314
    %318 = vrot.lane.b32.xlu0 %v316, 32
    %v319 = vpop.permute.xlu0 %318
    %v321 = vadd.f32 %v311, %v319
    %v322 = vtanh.pop %v321
    %324 = vrot.lane.b32.xlu0 %v322, 64
    %v325 = vpop.permute.xlu0 %324
    %v327 = vmul.f32 %v309, %v325
    %329 = vrot.lane.b32.xlu0 %v327, 32
    %v330 = vpop.permute.xlu0 %329
    %v331 = vsel %vm100, %v330, 0
    %333 = vmatprep.subr.mxu0 0.0
    %334 = vmatpush1.msra.mxu0 %v89
    %335 = vmatprep.subr.mxu0 0.0
    %336 = vmatpush1.msra.mxu0 %v90
    %337 = vmatprep.subr.mxu0 0.0
    %338 = vmatpush1.msra.mxu0 %v91
    %339 = vmatprep.subr.mxu0 0.0
    %340 = vmatpush1.msra.mxu0 %v92
    %341 = vmatprep.subr.mxu0 0.0
    %342 = vmatpush1.msra.mxu0 0.0
    %343 = vmatprep.subr.mxu0 0.0
    %344 = vmatpush1.msra.mxu0 0.0
    %345 = vmatprep.subr.mxu0 0.0
    %346 = vmatpush1.msra.mxu0 0.0
    %347 = vmatprep.subr.mxu0 0.0
    %348 = vmatpush1.msra.mxu0 0.0
    %349 = vmatprep.subr.mxu0 0.0
    %350 = vmatpush1.msra.mxu0 0.0
    %351 = vmatprep.subr.mxu0 0.0
    %352 = vmatpush1.msra.mxu0 0.0
    %353 = vmatprep.subr.mxu0 0.0
    %354 = vmatpush1.msra.mxu0 0.0
    %355 = vmatprep.subr.mxu0 0.0
    %356 = vmatpush1.msra.mxu0 0.0
    %357 = vmatprep.subr.mxu0 0.0
    %358 = vmatpush1.msra.mxu0 0.0
    %359 = vmatprep.subr.mxu0 0.0
    %360 = vmatpush1.msra.mxu0 0.0
    %361 = vmatprep.subr.mxu0 0.0
    %362 = vmatpush1.msra.mxu0 0.0
    %363 = vmatprep.subr.mxu0 0.0
    %364 = vmatpush1.msra.mxu0 0.0
    %365 = vmatprep.subr.mxu0 0.0
    %366 = vmatpush1.msra.mxu0 0.0
    %367 = vmatprep.subr.mxu0 0.0
    %368 = vmatpush1.msra.mxu0 0.0
    %369 = vmatprep.subr.mxu0 0.0
    %370 = vmatpush1.msra.mxu0 0.0
    %371 = vmatprep.subr.mxu0 0.0
    %372 = vmatpush1.msra.mxu0 0.0
    %373 = vmatprep.subr.mxu0 0.0
    %374 = vmatpush1.msra.mxu0 0.0
    %375 = vmatprep.subr.mxu0 0.0
    %376 = vmatpush1.msra.mxu0 0.0
    %377 = vmatprep.subr.mxu0 0.0
    %378 = vmatpush1.msra.mxu0 0.0
    %379 = vmatprep.subr.mxu0 0.0
    %380 = vmatpush1.msra.mxu0 0.0
    %381 = vmatprep.subr.mxu0 0.0
    %382 = vmatpush1.msra.mxu0 0.0
    %383 = vmatprep.subr.mxu0 0.0
    %384 = vmatpush1.msra.mxu0 0.0
    %385 = vmatprep.subr.mxu0 0.0
    %386 = vmatpush1.msra.mxu0 0.0
    %387 = vmatprep.subr.mxu0 0.0
    %388 = vmatpush1.msra.mxu0 0.0
    %389 = vmatprep.subr.mxu0 0.0
    %390 = vmatpush1.msra.mxu0 0.0
    %391 = vmatprep.subr.mxu0 0.0
    %392 = vmatpush1.msra.mxu0 0.0
    %393 = vmatprep.subr.mxu0 0.0
    %394 = vmatpush1.msra.mxu0 0.0
    %395 = vmatprep.subr.mxu0 0.0
    %396 = vmatpush1.msra.mxu0 0.0
    %397 = vmatprep.mubr.f32.mxu0 0.0
    %398 = vmatmul.mubr.f32.gmra.mrb[0].mxu0 %v331
    %v399 = vpop.f32.mrb[0].mxu0
    %v400 = vadd.f32 0.0, %v399
    %v401 = vpop.f32.mrb[0].mxu0
    %402 = vdwg.mxu0
    %v403 = vadd.f32 %v197, %v400
    %v404 = vxor.u32 %v403, 2147483648
    %v405 = vmul.f32 %v404, 1.442695
    %v406 = vpow.pop %v405
    %v407 = vadd.f32 %v406, 1.0
    %v408 = vrcp.pop %v407
    %v409 = vmul.f32 1.0, %v408
    %v410 = vtanh.pop %v403
    %v411 = vmul.f32 %v409, %v321
    %413 = vrot.lane.b32.xlu0 %v410, 64
    %v414 = vpop.permute.xlu0 %413
    %v416 = vmul.f32 %v409, %v414
    %418 = vrot.lane.b32.xlu0 %v416, 32
    %v419 = vpop.permute.xlu0 %418
    %v421 = vadd.f32 %v411, %v419
    %v422 = vtanh.pop %v421
    %424 = vrot.lane.b32.xlu0 %v422, 64
    %v425 = vpop.permute.xlu0 %424
    %v427 = vmul.f32 %v409, %v425
    %429 = vrot.lane.b32.xlu0 %v427, 32
    %v430 = vpop.permute.xlu0 %429
    %v431 = vsel %vm100, %v430, 0
    %433 = vmatprep.subr.mxu0 0.0
    %434 = vmatpush1.msra.mxu0 %v89
    %435 = vmatprep.subr.mxu0 0.0
    %436 = vmatpush1.msra.mxu0 %v90
    %437 = vmatprep.subr.mxu0 0.0
    %438 = vmatpush1.msra.mxu0 %v91
    %439 = vmatprep.subr.mxu0 0.0
    %440 = vmatpush1.msra.mxu0 %v92
    %441 = vmatprep.subr.mxu0 0.0
    %442 = vmatpush1.msra.mxu0 0.0
    %443 = vmatprep.subr.mxu0 0.0
    %444 = vmatpush1.msra.mxu0 0.0
    %445 = vmatprep.subr.mxu0 0.0
    %446 = vmatpush1.msra.mxu0 0.0
    %447 = vmatprep.subr.mxu0 0.0
    %448 = vmatpush1.msra.mxu0 0.0
    %449 = vmatprep.subr.mxu0 0.0
    %450 = vmatpush1.msra.mxu0 0.0
    %451 = vmatprep.subr.mxu0 0.0
    %452 = vmatpush1.msra.mxu0 0.0
    %453 = vmatprep.subr.mxu0 0.0
    %454 = vmatpush1.msra.mxu0 0.0
    %455 = vmatprep.subr.mxu0 0.0
    %456 = vmatpush1.msra.mxu0 0.0
    %457 = vmatprep.subr.mxu0 0.0
    %458 = vmatpush1.msra.mxu0 0.0
    %459 = vmatprep.subr.mxu0 0.0
    %460 = vmatpush1.msra.mxu0 0.0
    %461 = vmatprep.subr.mxu0 0.0
    %462 = vmatpush1.msra.mxu0 0.0
    %463 = vmatprep.subr.mxu0 0.0
    %464 = vmatpush1.msra.mxu0 0.0
    %465 = vmatprep.subr.mxu0 0.0
    %466 = vmatpush1.msra.mxu0 0.0
    %467 = vmatprep.subr.mxu0 0.0
    %468 = vmatpush1.msra.mxu0 0.0
    %469 = vmatprep.subr.mxu0 0.0
    %470 = vmatpush1.msra.mxu0 0.0
    %471 = vmatprep.subr.mxu0 0.0
    %472 = vmatpush1.msra.mxu0 0.0
    %473 = vmatprep.subr.mxu0 0.0
    %474 = vmatpush1.msra.mxu0 0.0
    %475 = vmatprep.subr.mxu0 0.0
    %476 = vmatpush1.msra.mxu0 0.0
    %477 = vmatprep.subr.mxu0 0.0
    %478 = vmatpush1.msra.mxu0 0.0
    %479 = vmatprep.subr.mxu0 0.0
    %480 = vmatpush1.msra.mxu0 0.0
    %481 = vmatprep.subr.mxu0 0.0
    %482 = vmatpush1.msra.mxu0 0.0
    %483 = vmatprep.subr.mxu0 0.0
    %484 = vmatpush1.msra.mxu0 0.0
    %485 = vmatprep.subr.mxu0 0.0
    %486 = vmatpush1.msra.mxu0 0.0
    %487 = vmatprep.subr.mxu0 0.0
    %488 = vmatpush1.msra.mxu0 0.0
    %489 = vmatprep.subr.mxu0 0.0
    %490 = vmatpush1.msra.mxu0 0.0
    %491 = vmatprep.subr.mxu0 0.0
    %492 = vmatpush1.msra.mxu0 0.0
    %493 = vmatprep.subr.mxu0 0.0
    %494 = vmatpush1.msra.mxu0 0.0
    %495 = vmatprep.subr.mxu0 0.0
    %496 = vmatpush1.msra.mxu0 0.0
    %497 = vmatprep.mubr.f32.mxu0 0.0
    %498 = vmatmul.mubr.f32.gmra.mrb[0].mxu0 %v431
    %v499 = vpop.f32.mrb[0].mxu0
    %v500 = vadd.f32 0.0, %v499
    %v501 = vpop.f32.mrb[0].mxu0
    %502 = vdwg.mxu0
    %v503 = vadd.f32 %v202, %v500
    %v504 = vxor.u32 %v503, 2147483648
    %v505 = vmul.f32 %v504, 1.442695
    %v506 = vpow.pop %v505
    %v507 = vadd.f32 %v506, 1.0
    %v508 = vrcp.pop %v507
    %v509 = vmul.f32 1.0, %v508
    %v510 = vtanh.pop %v503
    %v511 = vmul.f32 %v509, %v421
    %513 = vrot.lane.b32.xlu0 %v510, 64
    %v514 = vpop.permute.xlu0 %513
    %v516 = vmul.f32 %v509, %v514
    %518 = vrot.lane.b32.xlu0 %v516, 32
    %v519 = vpop.permute.xlu0 %518
    %v521 = vadd.f32 %v511, %v519
    %v522 = vtanh.pop %v521
    %524 = vrot.lane.b32.xlu0 %v522, 64
    %v525 = vpop.permute.xlu0 %524
    %v527 = vmul.f32 %v509, %v525
    %529 = vrot.lane.b32.xlu0 %v527, 32
    %v530 = vpop.permute.xlu0 %529
    %v531 = vsel %vm100, %v530, 0
    %533 = vmatprep.subr.mxu0 0.0
    %534 = vmatpush1.msra.mxu0 %v89
    %535 = vmatprep.subr.mxu0 0.0
    %536 = vmatpush1.msra.mxu0 %v90
    %537 = vmatprep.subr.mxu0 0.0
    %538 = vmatpush1.msra.mxu0 %v91
    %539 = vmatprep.subr.mxu0 0.0
    %540 = vmatpush1.msra.mxu0 %v92
    %541 = vmatprep.subr.mxu0 0.0
    %542 = vmatpush1.msra.mxu0 0.0
    %543 = vmatprep.subr.mxu0 0.0
    %544 = vmatpush1.msra.mxu0 0.0
    %545 = vmatprep.subr.mxu0 0.0
    %546 = vmatpush1.msra.mxu0 0.0
    %547 = vmatprep.subr.mxu0 0.0
    %548 = vmatpush1.msra.mxu0 0.0
    %549 = vmatprep.subr.mxu0 0.0
    %550 = vmatpush1.msra.mxu0 0.0
    %551 = vmatprep.subr.mxu0 0.0
    %552 = vmatpush1.msra.mxu0 0.0
    %553 = vmatprep.subr.mxu0 0.0
    %554 = vmatpush1.msra.mxu0 0.0
    %555 = vmatprep.subr.mxu0 0.0
    %556 = vmatpush1.msra.mxu0 0.0
    %557 = vmatprep.subr.mxu0 0.0
    %558 = vmatpush1.msra.mxu0 0.0
    %559 = vmatprep.subr.mxu0 0.0
    %560 = vmatpush1.msra.mxu0 0.0
    %561 = vmatprep.subr.mxu0 0.0
    %562 = vmatpush1.msra.mxu0 0.0
    %563 = vmatprep.subr.mxu0 0.0
    %564 = vmatpush1.msra.mxu0 0.0
    %565 = vmatprep.subr.mxu0 0.0
    %566 = vmatpush1.msra.mxu0 0.0
    %567 = vmatprep.subr.mxu0 0.0
    %568 = vmatpush1.msra.mxu0 0.0
    %569 = vmatprep.subr.mxu0 0.0
    %570 = vmatpush1.msra.mxu0 0.0
    %571 = vmatprep.subr.mxu0 0.0
    %572 = vmatpush1.msra.mxu0 0.0
    %573 = vmatprep.subr.mxu0 0.0
    %574 = vmatpush1.msra.mxu0 0.0
    %575 = vmatprep.subr.mxu0 0.0
    %576 = vmatpush1.msra.mxu0 0.0
    %577 = vmatprep.subr.mxu0 0.0
    %578 = vmatpush1.msra.mxu0 0.0
    %579 = vmatprep.subr.mxu0 0.0
    %580 = vmatpush1.msra.mxu0 0.0
    %581 = vmatprep.subr.mxu0 0.0
    %582 = vmatpush1.msra.mxu0 0.0
    %583 = vmatprep.subr.mxu0 0.0
    %584 = vmatpush1.msra.mxu0 0.0
    %585 = vmatprep.subr.mxu0 0.0
    %586 = vmatpush1.msra.mxu0 0.0
    %587 = vmatprep.subr.mxu0 0.0
    %588 = vmatpush1.msra.mxu0 0.0
    %589 = vmatprep.subr.mxu0 0.0
    %590 = vmatpush1.msra.mxu0 0.0
    %591 = vmatprep.subr.mxu0 0.0
    %592 = vmatpush1.msra.mxu0 0.0
    %593 = vmatprep.subr.mxu0 0.0
    %594 = vmatpush1.msra.mxu0 0.0
    %595 = vmatprep.subr.mxu0 0.0
    %596 = vmatpush1.msra.mxu0 0.0
    %597 = vmatprep.mubr.f32.mxu0 0.0
    %598 = vmatmul.mubr.f32.gmra.mrb[0].mxu0 %v531
    %v599 = vpop.f32.mrb[0].mxu0
    %v600 = vadd.f32 0.0, %v599
    %v601 = vpop.f32.mrb[0].mxu0
    %602 = vdwg.mxu0
    %v603 = vadd.f32 %v207, %v600
    %v604 = vxor.u32 %v603, 2147483648
    %v605 = vmul.f32 %v604, 1.442695
    %v606 = vpow.pop %v605
    %v607 = vadd.f32 %v606, 1.0
    %v608 = vrcp.pop %v607
    %v609 = vmul.f32 1.0, %v608
    %v610 = vtanh.pop %v603
    %v611 = vmul.f32 %v609, %v521
    %613 = vrot.lane.b32.xlu0 %v610, 64
    %v614 = vpop.permute.xlu0 %613
    %v616 = vmul.f32 %v609, %v614
    %618 = vrot.lane.b32.xlu0 %v616, 32
    %v619 = vpop.permute.xlu0 %618
    %v621 = vadd.f32 %v611, %v619
    %v622 = vtanh.pop %v621
    %624 = vrot.lane.b32.xlu0 %v622, 64
    %v625 = vpop.permute.xlu0 %624
    %v627 = vmul.f32 %v609, %v625
    %629 = vrot.lane.b32.xlu0 %v627, 32
    %v630 = vpop.permute.xlu0 %629
    %v631 = vsel %vm100, %v630, 0
    %633 = vmatprep.subr.mxu0 0.0
    %634 = vmatpush1.msra.mxu0 %v89
    %635 = vmatprep.subr.mxu0 0.0
    %636 = vmatpush1.msra.mxu0 %v90
    %637 = vmatprep.subr.mxu0 0.0
    %638 = vmatpush1.msra.mxu0 %v91
    %639 = vmatprep.subr.mxu0 0.0
    %640 = vmatpush1.msra.mxu0 %v92
    %641 = vmatprep.subr.mxu0 0.0
    %642 = vmatpush1.msra.mxu0 0.0
    %643 = vmatprep.subr.mxu0 0.0
    %644 = vmatpush1.msra.mxu0 0.0
    %645 = vmatprep.subr.mxu0 0.0
    %646 = vmatpush1.msra.mxu0 0.0
    %647 = vmatprep.subr.mxu0 0.0
    %648 = vmatpush1.msra.mxu0 0.0
    %649 = vmatprep.subr.mxu0 0.0
    %650 = vmatpush1.msra.mxu0 0.0
    %651 = vmatprep.subr.mxu0 0.0
    %652 = vmatpush1.msra.mxu0 0.0
    %653 = vmatprep.subr.mxu0 0.0
    %654 = vmatpush1.msra.mxu0 0.0
    %655 = vmatprep.subr.mxu0 0.0
    %656 = vmatpush1.msra.mxu0 0.0
    %657 = vmatprep.subr.mxu0 0.0
    %658 = vmatpush1.msra.mxu0 0.0
    %659 = vmatprep.subr.mxu0 0.0
    %660 = vmatpush1.msra.mxu0 0.0
    %661 = vmatprep.subr.mxu0 0.0
    %662 = vmatpush1.msra.mxu0 0.0
    %663 = vmatprep.subr.mxu0 0.0
    %664 = vmatpush1.msra.mxu0 0.0
    %665 = vmatprep.subr.mxu0 0.0
    %666 = vmatpush1.msra.mxu0 0.0
    %667 = vmatprep.subr.mxu0 0.0
    %668 = vmatpush1.msra.mxu0 0.0
    %669 = vmatprep.subr.mxu0 0.0
    %670 = vmatpush1.msra.mxu0 0.0
    %671 = vmatprep.subr.mxu0 0.0
    %672 = vmatpush1.msra.mxu0 0.0
    %673 = vmatprep.subr.mxu0 0.0
    %674 = vmatpush1.msra.mxu0 0.0
    %675 = vmatprep.subr.mxu0 0.0
    %676 = vmatpush1.msra.mxu0 0.0
    %677 = vmatprep.subr.mxu0 0.0
    %678 = vmatpush1.msra.mxu0 0.0
    %679 = vmatprep.subr.mxu0 0.0
    %680 = vmatpush1.msra.mxu0 0.0
    %681 = vmatprep.subr.mxu0 0.0
    %682 = vmatpush1.msra.mxu0 0.0
    %683 = vmatprep.subr.mxu0 0.0
    %684 = vmatpush1.msra.mxu0 0.0
    %685 = vmatprep.subr.mxu0 0.0
    %686 = vmatpush1.msra.mxu0 0.0
    %687 = vmatprep.subr.mxu0 0.0
    %688 = vmatpush1.msra.mxu0 0.0
    %689 = vmatprep.subr.mxu0 0.0
    %690 = vmatpush1.msra.mxu0 0.0
    %691 = vmatprep.subr.mxu0 0.0
    %692 = vmatpush1.msra.mxu0 0.0
    %693 = vmatprep.subr.mxu0 0.0
    %694 = vmatpush1.msra.mxu0 0.0
    %695 = vmatprep.subr.mxu0 0.0
    %696 = vmatpush1.msra.mxu0 0.0
    %697 = vmatprep.mubr.f32.mxu0 0.0
    %698 = vmatmul.mubr.f32.gmra.mrb[0].mxu0 %v631
    %v699 = vpop.f32.mrb[0].mxu0
    %v700 = vadd.f32 0.0, %v699
    %v701 = vpop.f32.mrb[0].mxu0
    %702 = vdwg.mxu0
    %v703 = vadd.f32 %v212, %v700
    %v704 = vxor.u32 %v703, 2147483648
    %v705 = vmul.f32 %v704, 1.442695
    %v706 = vpow.pop %v705
    %v707 = vadd.f32 %v706, 1.0
    %v708 = vrcp.pop %v707
    %v709 = vmul.f32 1.0, %v708
    %v710 = vtanh.pop %v703
    %v711 = vmul.f32 %v709, %v621
    %713 = vrot.lane.b32.xlu0 %v710, 64
    %v714 = vpop.permute.xlu0 %713
    %v716 = vmul.f32 %v709, %v714
    %718 = vrot.lane.b32.xlu0 %v716, 32
    %v719 = vpop.permute.xlu0 %718
    %v721 = vadd.f32 %v711, %v719
    %v722 = vtanh.pop %v721
    %724 = vrot.lane.b32.xlu0 %v722, 64
    %v725 = vpop.permute.xlu0 %724
    %v727 = vmul.f32 %v709, %v725
    %729 = vrot.lane.b32.xlu0 %v727, 32
    %v730 = vpop.permute.xlu0 %729
    %v731 = vsel %vm100, %v730, 0
    %733 = vmatprep.subr.mxu0 0.0
    %734 = vmatpush1.msra.mxu0 %v89
    %735 = vmatprep.subr.mxu0 0.0
    %736 = vmatpush1.msra.mxu0 %v90
    %737 = vmatprep.subr.mxu0 0.0
    %738 = vmatpush1.msra.mxu0 %v91
    %739 = vmatprep.subr.mxu0 0.0
    %740 = vmatpush1.msra.mxu0 %v92
    %741 = vmatprep.subr.mxu0 0.0
    %742 = vmatpush1.msra.mxu0 0.0
    %743 = vmatprep.subr.mxu0 0.0
    %744 = vmatpush1.msra.mxu0 0.0
    %745 = vmatprep.subr.mxu0 0.0
    %746 = vmatpush1.msra.mxu0 0.0
    %747 = vmatprep.subr.mxu0 0.0
    %748 = vmatpush1.msra.mxu0 0.0
    %749 = vmatprep.subr.mxu0 0.0
    %750 = vmatpush1.msra.mxu0 0.0
    %751 = vmatprep.subr.mxu0 0.0
    %752 = vmatpush1.msra.mxu0 0.0
    %753 = vmatprep.subr.mxu0 0.0
    %754 = vmatpush1.msra.mxu0 0.0
    %755 = vmatprep.subr.mxu0 0.0
    %756 = vmatpush1.msra.mxu0 0.0
    %757 = vmatprep.subr.mxu0 0.0
    %758 = vmatpush1.msra.mxu0 0.0
    %759 = vmatprep.subr.mxu0 0.0
    %760 = vmatpush1.msra.mxu0 0.0
    %761 = vmatprep.subr.mxu0 0.0
    %762 = vmatpush1.msra.mxu0 0.0
    %763 = vmatprep.subr.mxu0 0.0
    %764 = vmatpush1.msra.mxu0 0.0
    %765 = vmatprep.subr.mxu0 0.0
    %766 = vmatpush1.msra.mxu0 0.0
    %767 = vmatprep.subr.mxu0 0.0
    %768 = vmatpush1.msra.mxu0 0.0
    %769 = vmatprep.subr.mxu0 0.0
    %770 = vmatpush1.msra.mxu0 0.0
    %771 = vmatprep.subr.mxu0 0.0
    %772 = vmatpush1.msra.mxu0 0.0
    %773 = vmatprep.subr.mxu0 0.0
    %774 = vmatpush1.msra.mxu0 0.0
    %775 = vmatprep.subr.mxu0 0.0
    %776 = vmatpush1.msra.mxu0 0.0
    %777 = vmatprep.subr.mxu0 0.0
    %778 = vmatpush1.msra.mxu0 0.0
    %779 = vmatprep.subr.mxu0 0.0
    %780 = vmatpush1.msra.mxu0 0.0
    %781 = vmatprep.subr.mxu0 0.0
    %782 = vmatpush1.msra.mxu0 0.0
    %783 = vmatprep.subr.mxu0 0.0
    %784 = vmatpush1.msra.mxu0 0.0
    %785 = vmatprep.subr.mxu0 0.0
    %786 = vmatpush1.msra.mxu0 0.0
    %787 = vmatprep.subr.mxu0 0.0
    %788 = vmatpush1.msra.mxu0 0.0
    %789 = vmatprep.subr.mxu0 0.0
    %790 = vmatpush1.msra.mxu0 0.0
    %791 = vmatprep.subr.mxu0 0.0
    %792 = vmatpush1.msra.mxu0 0.0
    %793 = vmatprep.subr.mxu0 0.0
    %794 = vmatpush1.msra.mxu0 0.0
    %795 = vmatprep.subr.mxu0 0.0
    %796 = vmatpush1.msra.mxu0 0.0
    %797 = vmatprep.mubr.f32.mxu0 0.0
    %798 = vmatmul.mubr.f32.gmra.mrb[0].mxu0 %v731
    %v799 = vpop.f32.mrb[0].mxu0
    %v800 = vadd.f32 0.0, %v799
    %v801 = vpop.f32.mrb[0].mxu0
    %802 = vdwg.mxu0
    %v803 = vadd.f32 %v217, %v800
    %v804 = vxor.u32 %v803, 2147483648
    %v805 = vmul.f32 %v804, 1.442695
    %v806 = vpow.pop %v805
    %v807 = vadd.f32 %v806, 1.0
    %v808 = vrcp.pop %v807
    %v809 = vmul.f32 1.0, %v808
    %v810 = vtanh.pop %v803
    %v811 = vmul.f32 %v809, %v721
    %813 = vrot.lane.b32.xlu0 %v810, 64
    %v814 = vpop.permute.xlu0 %813
    %v816 = vmul.f32 %v809, %v814
    %818 = vrot.lane.b32.xlu0 %v816, 32
    %v819 = vpop.permute.xlu0 %818
    %v821 = vadd.f32 %v811, %v819
    %v822 = vtanh.pop %v821
    %824 = vrot.lane.b32.xlu0 %v822, 64
    %v825 = vpop.permute.xlu0 %824
    %v827 = vmul.f32 %v809, %v825
    %829 = vrot.lane.b32.xlu0 %v827, 32
    %v830 = vpop.permute.xlu0 %829
    %v831 = vsel %vm100, %v830, 0
    %833 = vmatprep.subr.mxu0 0.0
    %834 = vmatpush1.msra.mxu0 %v89
    %835 = vmatprep.subr.mxu0 0.0
    %836 = vmatpush1.msra.mxu0 %v90
    %837 = vmatprep.subr.mxu0 0.0
    %838 = vmatpush1.msra.mxu0 %v91
    %839 = vmatprep.subr.mxu0 0.0
    %840 = vmatpush1.msra.mxu0 %v92
    %841 = vmatprep.subr.mxu0 0.0
    %842 = vmatpush1.msra.mxu0 0.0
    %843 = vmatprep.subr.mxu0 0.0
    %844 = vmatpush1.msra.mxu0 0.0
    %845 = vmatprep.subr.mxu0 0.0
    %846 = vmatpush1.msra.mxu0 0.0
    %847 = vmatprep.subr.mxu0 0.0
    %848 = vmatpush1.msra.mxu0 0.0
    %849 = vmatprep.subr.mxu0 0.0
    %850 = vmatpush1.msra.mxu0 0.0
    %851 = vmatprep.subr.mxu0 0.0
    %852 = vmatpush1.msra.mxu0 0.0
    %853 = vmatprep.subr.mxu0 0.0
    %854 = vmatpush1.msra.mxu0 0.0
    %855 = vmatprep.subr.mxu0 0.0
    %856 = vmatpush1.msra.mxu0 0.0
    %857 = vmatprep.subr.mxu0 0.0
    %858 = vmatpush1.msra.mxu0 0.0
    %859 = vmatprep.subr.mxu0 0.0
    %860 = vmatpush1.msra.mxu0 0.0
    %861 = vmatprep.subr.mxu0 0.0
    %862 = vmatpush1.msra.mxu0 0.0
    %863 = vmatprep.subr.mxu0 0.0
    %864 = vmatpush1.msra.mxu0 0.0
    %865 = vmatprep.subr.mxu0 0.0
    %866 = vmatpush1.msra.mxu0 0.0
    %867 = vmatprep.subr.mxu0 0.0
    %868 = vmatpush1.msra.mxu0 0.0
    %869 = vmatprep.subr.mxu0 0.0
    %870 = vmatpush1.msra.mxu0 0.0
    %871 = vmatprep.subr.mxu0 0.0
    %872 = vmatpush1.msra.mxu0 0.0
    %873 = vmatprep.subr.mxu0 0.0
    %874 = vmatpush1.msra.mxu0 0.0
    %875 = vmatprep.subr.mxu0 0.0
    %876 = vmatpush1.msra.mxu0 0.0
    %877 = vmatprep.subr.mxu0 0.0
    %878 = vmatpush1.msra.mxu0 0.0
    %879 = vmatprep.subr.mxu0 0.0
    %880 = vmatpush1.msra.mxu0 0.0
    %881 = vmatprep.subr.mxu0 0.0
    %882 = vmatpush1.msra.mxu0 0.0
    %883 = vmatprep.subr.mxu0 0.0
    %884 = vmatpush1.msra.mxu0 0.0
    %885 = vmatprep.subr.mxu0 0.0
    %886 = vmatpush1.msra.mxu0 0.0
    %887 = vmatprep.subr.mxu0 0.0
    %888 = vmatpush1.msra.mxu0 0.0
    %889 = vmatprep.subr.mxu0 0.0
    %890 = vmatpush1.msra.mxu0 0.0
    %891 = vmatprep.subr.mxu0 0.0
    %892 = vmatpush1.msra.mxu0 0.0
    %893 = vmatprep.subr.mxu0 0.0
    %894 = vmatpush1.msra.mxu0 0.0
    %895 = vmatprep.subr.mxu0 0.0
    %896 = vmatpush1.msra.mxu0 0.0
    %897 = vmatprep.mubr.f32.mxu0 0.0
    %898 = vmatmul.mubr.f32.gmra.mrb[0].mxu0 %v831
    %v899 = vpop.f32.mrb[0].mxu0
    %v900 = vadd.f32 0.0, %v899
    %v901 = vpop.f32.mrb[0].mxu0
    %902 = vdwg.mxu0
    %v903 = vadd.f32 %v222, %v900
    %v904 = vxor.u32 %v903, 2147483648
    %v905 = vmul.f32 %v904, 1.442695
    %v906 = vpow.pop %v905
    %v907 = vadd.f32 %v906, 1.0
    %v908 = vrcp.pop %v907
    %v909 = vmul.f32 1.0, %v908
    %v910 = vtanh.pop %v903
    %v911 = vmul.f32 %v909, %v821
    %913 = vrot.lane.b32.xlu0 %v910, 64
    %v914 = vpop.permute.xlu0 %913
    %v916 = vmul.f32 %v909, %v914
    %918 = vrot.lane.b32.xlu0 %v916, 32
    %v919 = vpop.permute.xlu0 %918
    %v921 = vadd.f32 %v911, %v919
    %v922 = vtanh.pop %v921
    %924 = vrot.lane.b32.xlu0 %v922, 64
    %v925 = vpop.permute.xlu0 %924
    %v927 = vmul.f32 %v909, %v925
    %929 = vrot.lane.b32.xlu0 %v927, 32
    %v930 = vpop.permute.xlu0 %929
    %v931 = vsel %vm100, %v930, 0
    %933 = vmatprep.subr.mxu0 0.0
    %934 = vmatpush1.msra.mxu0 %v89
    %935 = vmatprep.subr.mxu0 0.0
    %936 = vmatpush1.msra.mxu0 %v90
    %937 = vmatprep.subr.mxu0 0.0
    %938 = vmatpush1.msra.mxu0 %v91
    %939 = vmatprep.subr.mxu0 0.0
    %940 = vmatpush1.msra.mxu0 %v92
    %941 = vmatprep.subr.mxu0 0.0
    %942 = vmatpush1.msra.mxu0 0.0
    %943 = vmatprep.subr.mxu0 0.0
    %944 = vmatpush1.msra.mxu0 0.0
    %945 = vmatprep.subr.mxu0 0.0
    %946 = vmatpush1.msra.mxu0 0.0
    %947 = vmatprep.subr.mxu0 0.0
    %948 = vmatpush1.msra.mxu0 0.0
    %949 = vmatprep.subr.mxu0 0.0
    %950 = vmatpush1.msra.mxu0 0.0
    %951 = vmatprep.subr.mxu0 0.0
    %952 = vmatpush1.msra.mxu0 0.0
    %953 = vmatprep.subr.mxu0 0.0
    %954 = vmatpush1.msra.mxu0 0.0
    %955 = vmatprep.subr.mxu0 0.0
    %956 = vmatpush1.msra.mxu0 0.0
    %957 = vmatprep.subr.mxu0 0.0
    %958 = vmatpush1.msra.mxu0 0.0
    %959 = vmatprep.subr.mxu0 0.0
    %960 = vmatpush1.msra.mxu0 0.0
    %961 = vmatprep.subr.mxu0 0.0
    %962 = vmatpush1.msra.mxu0 0.0
    %963 = vmatprep.subr.mxu0 0.0
    %964 = vmatpush1.msra.mxu0 0.0
    %965 = vmatprep.subr.mxu0 0.0
    %966 = vmatpush1.msra.mxu0 0.0
    %967 = vmatprep.subr.mxu0 0.0
    %968 = vmatpush1.msra.mxu0 0.0
    %969 = vmatprep.subr.mxu0 0.0
    %970 = vmatpush1.msra.mxu0 0.0
    %971 = vmatprep.subr.mxu0 0.0
    %972 = vmatpush1.msra.mxu0 0.0
    %973 = vmatprep.subr.mxu0 0.0
    %974 = vmatpush1.msra.mxu0 0.0
    %975 = vmatprep.subr.mxu0 0.0
    %976 = vmatpush1.msra.mxu0 0.0
    %977 = vmatprep.subr.mxu0 0.0
    %978 = vmatpush1.msra.mxu0 0.0
    %979 = vmatprep.subr.mxu0 0.0
    %980 = vmatpush1.msra.mxu0 0.0
    %981 = vmatprep.subr.mxu0 0.0
    %982 = vmatpush1.msra.mxu0 0.0
    %983 = vmatprep.subr.mxu0 0.0
    %984 = vmatpush1.msra.mxu0 0.0
    %985 = vmatprep.subr.mxu0 0.0
    %986 = vmatpush1.msra.mxu0 0.0
    %987 = vmatprep.subr.mxu0 0.0
    %988 = vmatpush1.msra.mxu0 0.0
    %989 = vmatprep.subr.mxu0 0.0
    %990 = vmatpush1.msra.mxu0 0.0
    %991 = vmatprep.subr.mxu0 0.0
    %992 = vmatpush1.msra.mxu0 0.0
    %993 = vmatprep.subr.mxu0 0.0
    %994 = vmatpush1.msra.mxu0 0.0
    %995 = vmatprep.subr.mxu0 0.0
    %996 = vmatpush1.msra.mxu0 0.0
    %997 = vmatprep.mubr.f32.mxu0 0.0
    %998 = vmatmul.mubr.f32.gmra.mrb[0].mxu0 %v931
    %v999 = vpop.f32.mrb[0].mxu0
    %v1000 = vadd.f32 0.0, %v999
    %v1001 = vpop.f32.mrb[0].mxu0
    %1002 = vdwg.mxu0
    %v1003 = vadd.f32 %v227, %v1000
    %v1004 = vxor.u32 %v1003, 2147483648
    %v1005 = vmul.f32 %v1004, 1.442695
    %v1006 = vpow.pop %v1005
    %v1007 = vadd.f32 %v1006, 1.0
    %v1008 = vrcp.pop %v1007
    %v1009 = vmul.f32 1.0, %v1008
    %v1010 = vtanh.pop %v1003
    %v1011 = vmul.f32 %v1009, %v921
    %1013 = vrot.lane.b32.xlu0 %v1010, 64
    %v1014 = vpop.permute.xlu0 %1013
    %v1016 = vmul.f32 %v1009, %v1014
    %1018 = vrot.lane.b32.xlu0 %v1016, 32
    %v1019 = vpop.permute.xlu0 %1018
    %v1021 = vadd.f32 %v1011, %v1019
    %v1022 = vtanh.pop %v1021
    %1024 = vrot.lane.b32.xlu0 %v1022, 64
    %v1025 = vpop.permute.xlu0 %1024
    %v1027 = vmul.f32 %v1009, %v1025
    %s1028 = scalar_lea.vmem [#allocation5], 32
    %v1029 = vld [vmem:[%s1028] sm:$0xff]
    %v1030 = vld [vmem:[%s1028 + $0x8] sm:$0xff]
    %v1031 = vld [vmem:[%s1028 + $0x10] sm:$0xff]
    %v1032 = vld [vmem:[%s1028 + $0x18] sm:$0xff]
    %s1033 = scalar_lea.vmem [#allocation7], 32
    %v1034 = vld [vmem:[%s1033] sm:$0xff]
    %v1035 = vld [vmem:[%s1033 + $0x8] sm:$0xff]
    %v1036 = vld [vmem:[%s1033 + $0x10] sm:$0xff]
    %v1037 = vld [vmem:[%s1033 + $0x18] sm:$0xff]
    %s1038 = scalar_lea.vmem %s3, 1
    %v1039 = vld [vmem:[%s1038] sm:$0x1]
    %v1041 = vlaneseq
    %v1042 = vshrl.u32 %v1041, 7
    %v1043 = vsub.s32 0, %v1042
    %v1044 = vrot.slane %v1039, %v1043
    %1047 = vrot.lane.b32.xlu0 %v1027, 32
    %v1048 = vpop.permute.xlu0 %1047
    %v1049 = vsel %vm100, %v1048, 0
    %1051 = vmatprep.subr.mxu0 0.0
    %1052 = vmatpush1.msra.mxu0 %v1029
    %1053 = vmatprep.subr.mxu0 0.0
    %1054 = vmatpush1.msra.mxu0 %v1030
    %1055 = vmatprep.subr.mxu0 0.0
    %1056 = vmatpush1.msra.mxu0 %v1031
    %1057 = vmatprep.subr.mxu0 0.0
    %1058 = vmatpush1.msra.mxu0 %v1032
    %1059 = vmatprep.subr.mxu0 0.0
    %1060 = vmatpush1.msra.mxu0 0.0
    %1061 = vmatprep.subr.mxu0 0.0
    %1062 = vmatpush1.msra.mxu0 0.0
    %1063 = vmatprep.subr.mxu0 0.0
    %1064 = vmatpush1.msra.mxu0 0.0
    %1065 = vmatprep.subr.mxu0 0.0
    %1066 = vmatpush1.msra.mxu0 0.0
    %1067 = vmatprep.subr.mxu0 0.0
    %1068 = vmatpush1.msra.mxu0 0.0
    %1069 = vmatprep.subr.mxu0 0.0
    %1070 = vmatpush1.msra.mxu0 0.0
    %1071 = vmatprep.subr.mxu0 0.0
    %1072 = vmatpush1.msra.mxu0 0.0
    %1073 = vmatprep.subr.mxu0 0.0
    %1074 = vmatpush1.msra.mxu0 0.0
    %1075 = vmatprep.subr.mxu0 0.0
    %1076 = vmatpush1.msra.mxu0 0.0
    %1077 = vmatprep.subr.mxu0 0.0
    %1078 = vmatpush1.msra.mxu0 0.0
    %1079 = vmatprep.subr.mxu0 0.0
    %1080 = vmatpush1.msra.mxu0 0.0
    %1081 = vmatprep.subr.mxu0 0.0
    %1082 = vmatpush1.msra.mxu0 0.0
    %1083 = vmatprep.subr.mxu0 0.0
    %1084 = vmatpush1.msra.mxu0 0.0
    %1085 = vmatprep.subr.mxu0 0.0
    %1086 = vmatpush1.msra.mxu0 0.0
    %1087 = vmatprep.subr.mxu0 0.0
    %1088 = vmatpush1.msra.mxu0 0.0
    %1089 = vmatprep.subr.mxu0 0.0
    %1090 = vmatpush1.msra.mxu0 0.0
    %1091 = vmatprep.subr.mxu0 0.0
    %1092 = vmatpush1.msra.mxu0 0.0
    %1093 = vmatprep.subr.mxu0 0.0
    %1094 = vmatpush1.msra.mxu0 0.0
    %1095 = vmatprep.subr.mxu0 0.0
    %1096 = vmatpush1.msra.mxu0 0.0
    %1097 = vmatprep.subr.mxu0 0.0
    %1098 = vmatpush1.msra.mxu0 0.0
    %1099 = vmatprep.subr.mxu0 0.0
    %1100 = vmatpush1.msra.mxu0 0.0
    %1101 = vmatprep.subr.mxu0 0.0
    %1102 = vmatpush1.msra.mxu0 0.0
    %1103 = vmatprep.subr.mxu0 0.0
    %1104 = vmatpush1.msra.mxu0 0.0
    %1105 = vmatprep.subr.mxu0 0.0
    %1106 = vmatpush1.msra.mxu0 0.0
    %1107 = vmatprep.subr.mxu0 0.0
    %1108 = vmatpush1.msra.mxu0 0.0
    %1109 = vmatprep.subr.mxu0 0.0
    %1110 = vmatpush1.msra.mxu0 0.0
    %1111 = vmatprep.subr.mxu0 0.0
    %1112 = vmatpush1.msra.mxu0 0.0
    %1113 = vmatprep.subr.mxu0 0.0
    %1114 = vmatpush1.msra.mxu0 0.0
    %1115 = vmatprep.mubr.f32.mxu0 0.0
    %1116 = vmatmul.mubr.f32.gmra.mrb[0].mxu0 %v331
    %v1117 = vpop.f32.mrb[0].mxu0
    %v1118 = vadd.f32 %v1044, %v1117
    %v1119 = vpop.f32.mrb[0].mxu0
    %1120 = vmatprep.mubr.f32.mxu0 0.0
    %1121 = vmatmul.mubr.f32.gmra.mrb[0].mxu0 %v431
    %v1122 = vpop.f32.mrb[0].mxu0
    %v1123 = vadd.f32 %v1044, %v1122
    %v1124 = vpop.f32.mrb[0].mxu0
    %1125 = vmatprep.mubr.f32.mxu0 0.0
    %1126 = vmatmul.mubr.f32.gmra.mrb[0].mxu0 %v531
    %v1127 = vpop.f32.mrb[0].mxu0
    %v1128 = vadd.f32 %v1044, %v1127
    %v1129 = vpop.f32.mrb[0].mxu0
    %1130 = vmatprep.mubr.f32.mxu0 0.0
    %1131 = vmatmul.mubr.f32.gmra.mrb[0].mxu0 %v631
    %v1132 = vpop.f32.mrb[0].mxu0
    %v1133 = vadd.f32 %v1044, %v1132
    %v1134 = vpop.f32.mrb[0].mxu0
    %1135 = vmatprep.mubr.f32.mxu0 0.0
    %1136 = vmatmul.mubr.f32.gmra.mrb[0].mxu0 %v731
    %v1137 = vpop.f32.mrb[0].mxu0
    %v1138 = vadd.f32 %v1044, %v1137
    %v1139 = vpop.f32.mrb[0].mxu0
    %1140 = vmatprep.mubr.f32.mxu0 0.0
    %1141 = vmatmul.mubr.f32.gmra.mrb[0].mxu0 %v831
    %v1142 = vpop.f32.mrb[0].mxu0
    %v1143 = vadd.f32 %v1044, %v1142
    %v1144 = vpop.f32.mrb[0].mxu0
    %1145 = vmatprep.mubr.f32.mxu0 0.0
    %1146 = vmatmul.mubr.f32.gmra.mrb[0].mxu0 %v931
    %v1147 = vpop.f32.mrb[0].mxu0
    %v1148 = vadd.f32 %v1044, %v1147
    %v1149 = vpop.f32.mrb[0].mxu0
    %1150 = vmatprep.mubr.f32.mxu0 0.0
    %1151 = vmatmul.mubr.f32.gmra.mrb[0].mxu0 %v1049
    %v1152 = vpop.f32.mrb[0].mxu0
    %v1153 = vadd.f32 %v1044, %v1152
    %v1154 = vpop.f32.mrb[0].mxu0
    %1155 = vdwg.mxu0
    %1156 = vmatprep.subr.mxu0 0.0
    %1157 = vmatpush1.msra.mxu0 %v1034
    %1158 = vmatprep.subr.mxu0 0.0
    %1159 = vmatpush1.msra.mxu0 %v1035
    %1160 = vmatprep.subr.mxu0 0.0
    %1161 = vmatpush1.msra.mxu0 %v1036
    %1162 = vmatprep.subr.mxu0 0.0
    %1163 = vmatpush1.msra.mxu0 %v1037
    %1164 = vmatprep.subr.mxu0 0.0
    %1165 = vmatpush1.msra.mxu0 0.0
    %1166 = vmatprep.subr.mxu0 0.0
    %1167 = vmatpush1.msra.mxu0 0.0
    %1168 = vmatprep.subr.mxu0 0.0
    %1169 = vmatpush1.msra.mxu0 0.0
    %1170 = vmatprep.subr.mxu0 0.0
    %1171 = vmatpush1.msra.mxu0 0.0
    %1172 = vmatprep.subr.mxu0 0.0
    %1173 = vmatpush1.msra.mxu0 0.0
    %1174 = vmatprep.subr.mxu0 0.0
    %1175 = vmatpush1.msra.mxu0 0.0
    %1176 = vmatprep.subr.mxu0 0.0
    %1177 = vmatpush1.msra.mxu0 0.0
    %1178 = vmatprep.subr.mxu0 0.0
    %1179 = vmatpush1.msra.mxu0 0.0
    %1180 = vmatprep.subr.mxu0 0.0
    %1181 = vmatpush1.msra.mxu0 0.0
    %1182 = vmatprep.subr.mxu0 0.0
    %1183 = vmatpush1.msra.mxu0 0.0
    %1184 = vmatprep.subr.mxu0 0.0
    %1185 = vmatpush1.msra.mxu0 0.0
    %1186 = vmatprep.subr.mxu0 0.0
    %1187 = vmatpush1.msra.mxu0 0.0
    %1188 = vmatprep.subr.mxu0 0.0
    %1189 = vmatpush1.msra.mxu0 0.0
    %1190 = vmatprep.subr.mxu0 0.0
    %1191 = vmatpush1.msra.mxu0 0.0
    %1192 = vmatprep.subr.mxu0 0.0
    %1193 = vmatpush1.msra.mxu0 0.0
    %1194 = vmatprep.subr.mxu0 0.0
    %1195 = vmatpush1.msra.mxu0 0.0
    %1196 = vmatprep.subr.mxu0 0.0
    %1197 = vmatpush1.msra.mxu0 0.0
    %1198 = vmatprep.subr.mxu0 0.0
    %1199 = vmatpush1.msra.mxu0 0.0
    %1200 = vmatprep.subr.mxu0 0.0
    %1201 = vmatpush1.msra.mxu0 0.0
    %1202 = vmatprep.subr.mxu0 0.0
    %1203 = vmatpush1.msra.mxu0 0.0
    %1204 = vmatprep.subr.mxu0 0.0
    %1205 = vmatpush1.msra.mxu0 0.0
    %1206 = vmatprep.subr.mxu0 0.0
    %1207 = vmatpush1.msra.mxu0 0.0
    %1208 = vmatprep.subr.mxu0 0.0
    %1209 = vmatpush1.msra.mxu0 0.0
    %1210 = vmatprep.subr.mxu0 0.0
    %1211 = vmatpush1.msra.mxu0 0.0
    %1212 = vmatprep.subr.mxu0 0.0
    %1213 = vmatpush1.msra.mxu0 0.0
    %1214 = vmatprep.subr.mxu0 0.0
    %1215 = vmatpush1.msra.mxu0 0.0
    %1216 = vmatprep.subr.mxu0 0.0
    %1217 = vmatpush1.msra.mxu0 0.0
    %1218 = vmatprep.subr.mxu0 0.0
    %1219 = vmatpush1.msra.mxu0 0.0
    %1220 = vmatprep.mubr.f32.mxu0 0.0
    %1221 = vmatmul.mubr.f32.gmra.mrb[0].mxu0 %v231
    %v1222 = vpop.f32.mrb[0].mxu0
    %v1223 = vadd.f32 0.0, %v1222
    %v1224 = vpop.f32.mrb[0].mxu0
    %1225 = vdwg.mxu0
    %v1226 = vadd.f32 %v1118, %v1223
    %v1227 = vxor.u32 %v1226, 2147483648
    %v1228 = vmul.f32 %v1227, 1.442695
    %v1229 = vpow.pop %v1228
    %v1230 = vadd.f32 %v1229, 1.0
    %v1231 = vrcp.pop %v1230
    %v1232 = vmul.f32 1.0, %v1231
    %v1233 = vtanh.pop %v1226
    %v1234 = vmul.f32 %v1232, 0.0
    %1236 = vrot.lane.b32.xlu0 %v1233, 64
    %v1237 = vpop.permute.xlu0 %1236
    %v1239 = vmul.f32 %v1232, %v1237
    %1241 = vrot.lane.b32.xlu0 %v1239, 32
    %v1242 = vpop.permute.xlu0 %1241
    %v1244 = vadd.f32 %v1234, %v1242
    %v1245 = vtanh.pop %v1244
    %1247 = vrot.lane.b32.xlu0 %v1245, 64
    %v1248 = vpop.permute.xlu0 %1247
    %v1250 = vmul.f32 %v1232, %v1248
    %1252 = vrot.lane.b32.xlu0 %v1250, 32
    %v1253 = vpop.permute.xlu0 %1252
    %v1254 = vsel %vm100, %v1253, 0
    %1256 = vmatprep.subr.mxu0 0.0
    %1257 = vmatpush1.msra.mxu0 %v1034
    %1258 = vmatprep.subr.mxu0 0.0
    %1259 = vmatpush1.msra.mxu0 %v1035
    %1260 = vmatprep.subr.mxu0 0.0
    %1261 = vmatpush1.msra.mxu0 %v1036
    %1262 = vmatprep.subr.mxu0 0.0
    %1263 = vmatpush1.msra.mxu0 %v1037
    %1264 = vmatprep.subr.mxu0 0.0
    %1265 = vmatpush1.msra.mxu0 0.0
    %1266 = vmatprep.subr.mxu0 0.0
    %1267 = vmatpush1.msra.mxu0 0.0
    %1268 = vmatprep.subr.mxu0 0.0
    %1269 = vmatpush1.msra.mxu0 0.0
    %1270 = vmatprep.subr.mxu0 0.0
    %1271 = vmatpush1.msra.mxu0 0.0
    %1272 = vmatprep.subr.mxu0 0.0
    %1273 = vmatpush1.msra.mxu0 0.0
    %1274 = vmatprep.subr.mxu0 0.0
    %1275 = vmatpush1.msra.mxu0 0.0
    %1276 = vmatprep.subr.mxu0 0.0
    %1277 = vmatpush1.msra.mxu0 0.0
    %1278 = vmatprep.subr.mxu0 0.0
    %1279 = vmatpush1.msra.mxu0 0.0
    %1280 = vmatprep.subr.mxu0 0.0
    %1281 = vmatpush1.msra.mxu0 0.0
    %1282 = vmatprep.subr.mxu0 0.0
    %1283 = vmatpush1.msra.mxu0 0.0
    %1284 = vmatprep.subr.mxu0 0.0
    %1285 = vmatpush1.msra.mxu0 0.0
    %1286 = vmatprep.subr.mxu0 0.0
    %1287 = vmatpush1.msra.mxu0 0.0
    %1288 = vmatprep.subr.mxu0 0.0
    %1289 = vmatpush1.msra.mxu0 0.0
    %1290 = vmatprep.subr.mxu0 0.0
    %1291 = vmatpush1.msra.mxu0 0.0
    %1292 = vmatprep.subr.mxu0 0.0
    %1293 = vmatpush1.msra.mxu0 0.0
    %1294 = vmatprep.subr.mxu0 0.0
    %1295 = vmatpush1.msra.mxu0 0.0
    %1296 = vmatprep.subr.mxu0 0.0
    %1297 = vmatpush1.msra.mxu0 0.0
    %1298 = vmatprep.subr.mxu0 0.0
    %1299 = vmatpush1.msra.mxu0 0.0
    %1300 = vmatprep.subr.mxu0 0.0
    %1301 = vmatpush1.msra.mxu0 0.0
    %1302 = vmatprep.subr.mxu0 0.0
    %1303 = vmatpush1.msra.mxu0 0.0
    %1304 = vmatprep.subr.mxu0 0.0
    %1305 = vmatpush1.msra.mxu0 0.0
    %1306 = vmatprep.subr.mxu0 0.0
    %1307 = vmatpush1.msra.mxu0 0.0
    %1308 = vmatprep.subr.mxu0 0.0
    %1309 = vmatpush1.msra.mxu0 0.0
    %1310 = vmatprep.subr.mxu0 0.0
    %1311 = vmatpush1.msra.mxu0 0.0
    %1312 = vmatprep.subr.mxu0 0.0
    %1313 = vmatpush1.msra.mxu0 0.0
    %1314 = vmatprep.subr.mxu0 0.0
    %1315 = vmatpush1.msra.mxu0 0.0
    %1316 = vmatprep.subr.mxu0 0.0
    %1317 = vmatpush1.msra.mxu0 0.0
    %1318 = vmatprep.subr.mxu0 0.0
    %1319 = vmatpush1.msra.mxu0 0.0
    %1320 = vmatprep.mubr.f32.mxu0 0.0
    %1321 = vmatmul.mubr.f32.gmra.mrb[0].mxu0 %v1254
    %v1322 = vpop.f32.mrb[0].mxu0
    %v1323 = vadd.f32 0.0, %v1322
    %v1324 = vpop.f32.mrb[0].mxu0
    %1325 = vdwg.mxu0
    %v1326 = vadd.f32 %v1123, %v1323
    %v1327 = vxor.u32 %v1326, 2147483648
    %v1328 = vmul.f32 %v1327, 1.442695
    %v1329 = vpow.pop %v1328
    %v1330 = vadd.f32 %v1329, 1.0
    %v1331 = vrcp.pop %v1330
    %v1332 = vmul.f32 1.0, %v1331
    %v1333 = vtanh.pop %v1326
    %v1334 = vmul.f32 %v1332, %v1244
    %1336 = vrot.lane.b32.xlu0 %v1333, 64
    %v1337 = vpop.permute.xlu0 %1336
    %v1339 = vmul.f32 %v1332, %v1337
    %1341 = vrot.lane.b32.xlu0 %v1339, 32
    %v1342 = vpop.permute.xlu0 %1341
    %v1344 = vadd.f32 %v1334, %v1342
    %v1345 = vtanh.pop %v1344
    %1347 = vrot.lane.b32.xlu0 %v1345, 64
    %v1348 = vpop.permute.xlu0 %1347
    %v1350 = vmul.f32 %v1332, %v1348
    %1352 = vrot.lane.b32.xlu0 %v1350, 32
    %v1353 = vpop.permute.xlu0 %1352
    %v1354 = vsel %vm100, %v1353, 0
    %1356 = vmatprep.subr.mxu0 0.0
    %1357 = vmatpush1.msra.mxu0 %v1034
    %1358 = vmatprep.subr.mxu0 0.0
    %1359 = vmatpush1.msra.mxu0 %v1035
    %1360 = vmatprep.subr.mxu0 0.0
    %1361 = vmatpush1.msra.mxu0 %v1036
    %1362 = vmatprep.subr.mxu0 0.0
    %1363 = vmatpush1.msra.mxu0 %v1037
    %1364 = vmatprep.subr.mxu0 0.0
    %1365 = vmatpush1.msra.mxu0 0.0
    %1366 = vmatprep.subr.mxu0 0.0
    %1367 = vmatpush1.msra.mxu0 0.0
    %1368 = vmatprep.subr.mxu0 0.0
    %1369 = vmatpush1.msra.mxu0 0.0
    %1370 = vmatprep.subr.mxu0 0.0
    %1371 = vmatpush1.msra.mxu0 0.0
    %1372 = vmatprep.subr.mxu0 0.0
    %1373 = vmatpush1.msra.mxu0 0.0
    %1374 = vmatprep.subr.mxu0 0.0
    %1375 = vmatpush1.msra.mxu0 0.0
    %1376 = vmatprep.subr.mxu0 0.0
    %1377 = vmatpush1.msra.mxu0 0.0
    %1378 = vmatprep.subr.mxu0 0.0
    %1379 = vmatpush1.msra.mxu0 0.0
    %1380 = vmatprep.subr.mxu0 0.0
    %1381 = vmatpush1.msra.mxu0 0.0
    %1382 = vmatprep.subr.mxu0 0.0
    %1383 = vmatpush1.msra.mxu0 0.0
    %1384 = vmatprep.subr.mxu0 0.0
    %1385 = vmatpush1.msra.mxu0 0.0
    %1386 = vmatprep.subr.mxu0 0.0
    %1387 = vmatpush1.msra.mxu0 0.0
    %1388 = vmatprep.subr.mxu0 0.0
    %1389 = vmatpush1.msra.mxu0 0.0
    %1390 = vmatprep.subr.mxu0 0.0
    %1391 = vmatpush1.msra.mxu0 0.0
    %1392 = vmatprep.subr.mxu0 0.0
    %1393 = vmatpush1.msra.mxu0 0.0
    %1394 = vmatprep.subr.mxu0 0.0
    %1395 = vmatpush1.msra.mxu0 0.0
    %1396 = vmatprep.subr.mxu0 0.0
    %1397 = vmatpush1.msra.mxu0 0.0
    %1398 = vmatprep.subr.mxu0 0.0
    %1399 = vmatpush1.msra.mxu0 0.0
    %1400 = vmatprep.subr.mxu0 0.0
    %1401 = vmatpush1.msra.mxu0 0.0
    %1402 = vmatprep.subr.mxu0 0.0
    %1403 = vmatpush1.msra.mxu0 0.0
    %1404 = vmatprep.subr.mxu0 0.0
    %1405 = vmatpush1.msra.mxu0 0.0
    %1406 = vmatprep.subr.mxu0 0.0
    %1407 = vmatpush1.msra.mxu0 0.0
    %1408 = vmatprep.subr.mxu0 0.0
    %1409 = vmatpush1.msra.mxu0 0.0
    %1410 = vmatprep.subr.mxu0 0.0
    %1411 = vmatpush1.msra.mxu0 0.0
    %1412 = vmatprep.subr.mxu0 0.0
    %1413 = vmatpush1.msra.mxu0 0.0
    %1414 = vmatprep.subr.mxu0 0.0
    %1415 = vmatpush1.msra.mxu0 0.0
    %1416 = vmatprep.subr.mxu0 0.0
    %1417 = vmatpush1.msra.mxu0 0.0
    %1418 = vmatprep.subr.mxu0 0.0
    %1419 = vmatpush1.msra.mxu0 0.0
    %1420 = vmatprep.mubr.f32.mxu0 0.0
    %1421 = vmatmul.mubr.f32.gmra.mrb[0].mxu0 %v1354
    %v1422 = vpop.f32.mrb[0].mxu0
    %v1423 = vadd.f32 0.0, %v1422
    %v1424 = vpop.f32.mrb[0].mxu0
    %1425 = vdwg.mxu0
    %v1426 = vadd.f32 %v1128, %v1423
    %v1427 = vxor.u32 %v1426, 2147483648
    %v1428 = vmul.f32 %v1427, 1.442695
    %v1429 = vpow.pop %v1428
    %v1430 = vadd.f32 %v1429, 1.0
    %v1431 = vrcp.pop %v1430
    %v1432 = vmul.f32 1.0, %v1431
    %v1433 = vtanh.pop %v1426
    %v1434 = vmul.f32 %v1432, %v1344
    %1436 = vrot.lane.b32.xlu0 %v1433, 64
    %v1437 = vpop.permute.xlu0 %1436
    %v1439 = vmul.f32 %v1432, %v1437
    %1441 = vrot.lane.b32.xlu0 %v1439, 32
    %v1442 = vpop.permute.xlu0 %1441
    %v1444 = vadd.f32 %v1434, %v1442
    %v1445 = vtanh.pop %v1444
    %1447 = vrot.lane.b32.xlu0 %v1445, 64
    %v1448 = vpop.permute.xlu0 %1447
    %v1450 = vmul.f32 %v1432, %v1448
    %1452 = vrot.lane.b32.xlu0 %v1450, 32
    %v1453 = vpop.permute.xlu0 %1452
    %v1454 = vsel %vm100, %v1453, 0
    %1456 = vmatprep.subr.mxu0 0.0
    %1457 = vmatpush1.msra.mxu0 %v1034
    %1458 = vmatprep.subr.mxu0 0.0
    %1459 = vmatpush1.msra.mxu0 %v1035
    %1460 = vmatprep.subr.mxu0 0.0
    %1461 = vmatpush1.msra.mxu0 %v1036
    %1462 = vmatprep.subr.mxu0 0.0
    %1463 = vmatpush1.msra.mxu0 %v1037
    %1464 = vmatprep.subr.mxu0 0.0
    %1465 = vmatpush1.msra.mxu0 0.0
    %1466 = vmatprep.subr.mxu0 0.0
    %1467 = vmatpush1.msra.mxu0 0.0
    %1468 = vmatprep.subr.mxu0 0.0
    %1469 = vmatpush1.msra.mxu0 0.0
    %1470 = vmatprep.subr.mxu0 0.0
    %1471 = vmatpush1.msra.mxu0 0.0
    %1472 = vmatprep.subr.mxu0 0.0
    %1473 = vmatpush1.msra.mxu0 0.0
    %1474 = vmatprep.subr.mxu0 0.0
    %1475 = vmatpush1.msra.mxu0 0.0
    %1476 = vmatprep.subr.mxu0 0.0
    %1477 = vmatpush1.msra.mxu0 0.0
    %1478 = vmatprep.subr.mxu0 0.0
    %1479 = vmatpush1.msra.mxu0 0.0
    %1480 = vmatprep.subr.mxu0 0.0
    %1481 = vmatpush1.msra.mxu0 0.0
    %1482 = vmatprep.subr.mxu0 0.0
    %1483 = vmatpush1.msra.mxu0 0.0
    %1484 = vmatprep.subr.mxu0 0.0
    %1485 = vmatpush1.msra.mxu0 0.0
    %1486 = vmatprep.subr.mxu0 0.0
    %1487 = vmatpush1.msra.mxu0 0.0
    %1488 = vmatprep.subr.mxu0 0.0
    %1489 = vmatpush1.msra.mxu0 0.0
    %1490 = vmatprep.subr.mxu0 0.0
    %1491 = vmatpush1.msra.mxu0 0.0
    %1492 = vmatprep.subr.mxu0 0.0
    %1493 = vmatpush1.msra.mxu0 0.0
    %1494 = vmatprep.subr.mxu0 0.0
    %1495 = vmatpush1.msra.mxu0 0.0
    %1496 = vmatprep.subr.mxu0 0.0
    %1497 = vmatpush1.msra.mxu0 0.0
    %1498 = vmatprep.subr.mxu0 0.0
    %1499 = vmatpush1.msra.mxu0 0.0
    %1500 = vmatprep.subr.mxu0 0.0
    %1501 = vmatpush1.msra.mxu0 0.0
    %1502 = vmatprep.subr.mxu0 0.0
    %1503 = vmatpush1.msra.mxu0 0.0
    %1504 = vmatprep.subr.mxu0 0.0
    %1505 = vmatpush1.msra.mxu0 0.0
    %1506 = vmatprep.subr.mxu0 0.0
    %1507 = vmatpush1.msra.mxu0 0.0
    %1508 = vmatprep.subr.mxu0 0.0
    %1509 = vmatpush1.msra.mxu0 0.0
    %1510 = vmatprep.subr.mxu0 0.0
    %1511 = vmatpush1.msra.mxu0 0.0
    %1512 = vmatprep.subr.mxu0 0.0
    %1513 = vmatpush1.msra.mxu0 0.0
    %1514 = vmatprep.subr.mxu0 0.0
    %1515 = vmatpush1.msra.mxu0 0.0
    %1516 = vmatprep.subr.mxu0 0.0
    %1517 = vmatpush1.msra.mxu0 0.0
    %1518 = vmatprep.subr.mxu0 0.0
    %1519 = vmatpush1.msra.mxu0 0.0
    %1520 = vmatprep.mubr.f32.mxu0 0.0
    %1521 = vmatmul.mubr.f32.gmra.mrb[0].mxu0 %v1454
    %v1522 = vpop.f32.mrb[0].mxu0
    %v1523 = vadd.f32 0.0, %v1522
    %v1524 = vpop.f32.mrb[0].mxu0
    %1525 = vdwg.mxu0
    %v1526 = vadd.f32 %v1133, %v1523
    %v1527 = vxor.u32 %v1526, 2147483648
    %v1528 = vmul.f32 %v1527, 1.442695
    %v1529 = vpow.pop %v1528
    %v1530 = vadd.f32 %v1529, 1.0
    %v1531 = vrcp.pop %v1530
    %v1532 = vmul.f32 1.0, %v1531
    %v1533 = vtanh.pop %v1526
    %v1534 = vmul.f32 %v1532, %v1444
    %1536 = vrot.lane.b32.xlu0 %v1533, 64
    %v1537 = vpop.permute.xlu0 %1536
    %v1539 = vmul.f32 %v1532, %v1537
    %1541 = vrot.lane.b32.xlu0 %v1539, 32
    %v1542 = vpop.permute.xlu0 %1541
    %v1544 = vadd.f32 %v1534, %v1542
    %v1545 = vtanh.pop %v1544
    %1547 = vrot.lane.b32.xlu0 %v1545, 64
    %v1548 = vpop.permute.xlu0 %1547
    %v1550 = vmul.f32 %v1532, %v1548
    %1552 = vrot.lane.b32.xlu0 %v1550, 32
    %v1553 = vpop.permute.xlu0 %1552
    %v1554 = vsel %vm100, %v1553, 0
    %1556 = vmatprep.subr.mxu0 0.0
    %1557 = vmatpush1.msra.mxu0 %v1034
    %1558 = vmatprep.subr.mxu0 0.0
    %1559 = vmatpush1.msra.mxu0 %v1035
    %1560 = vmatprep.subr.mxu0 0.0
    %1561 = vmatpush1.msra.mxu0 %v1036
    %1562 = vmatprep.subr.mxu0 0.0
    %1563 = vmatpush1.msra.mxu0 %v1037
    %1564 = vmatprep.subr.mxu0 0.0
    %1565 = vmatpush1.msra.mxu0 0.0
    %1566 = vmatprep.subr.mxu0 0.0
    %1567 = vmatpush1.msra.mxu0 0.0
    %1568 = vmatprep.subr.mxu0 0.0
    %1569 = vmatpush1.msra.mxu0 0.0
    %1570 = vmatprep.subr.mxu0 0.0
    %1571 = vmatpush1.msra.mxu0 0.0
    %1572 = vmatprep.subr.mxu0 0.0
    %1573 = vmatpush1.msra.mxu0 0.0
    %1574 = vmatprep.subr.mxu0 0.0
    %1575 = vmatpush1.msra.mxu0 0.0
    %1576 = vmatprep.subr.mxu0 0.0
    %1577 = vmatpush1.msra.mxu0 0.0
    %1578 = vmatprep.subr.mxu0 0.0
    %1579 = vmatpush1.msra.mxu0 0.0
    %1580 = vmatprep.subr.mxu0 0.0
    %1581 = vmatpush1.msra.mxu0 0.0
    %1582 = vmatprep.subr.mxu0 0.0
    %1583 = vmatpush1.msra.mxu0 0.0
    %1584 = vmatprep.subr.mxu0 0.0
    %1585 = vmatpush1.msra.mxu0 0.0
    %1586 = vmatprep.subr.mxu0 0.0
    %1587 = vmatpush1.msra.mxu0 0.0
    %1588 = vmatprep.subr.mxu0 0.0
    %1589 = vmatpush1.msra.mxu0 0.0
    %1590 = vmatprep.subr.mxu0 0.0
    %1591 = vmatpush1.msra.mxu0 0.0
    %1592 = vmatprep.subr.mxu0 0.0
    %1593 = vmatpush1.msra.mxu0 0.0
    %1594 = vmatprep.subr.mxu0 0.0
    %1595 = vmatpush1.msra.mxu0 0.0
    %1596 = vmatprep.subr.mxu0 0.0
    %1597 = vmatpush1.msra.mxu0 0.0
    %1598 = vmatprep.subr.mxu0 0.0
    %1599 = vmatpush1.msra.mxu0 0.0
    %1600 = vmatprep.subr.mxu0 0.0
    %1601 = vmatpush1.msra.mxu0 0.0
    %1602 = vmatprep.subr.mxu0 0.0
    %1603 = vmatpush1.msra.mxu0 0.0
    %1604 = vmatprep.subr.mxu0 0.0
    %1605 = vmatpush1.msra.mxu0 0.0
    %1606 = vmatprep.subr.mxu0 0.0
    %1607 = vmatpush1.msra.mxu0 0.0
    %1608 = vmatprep.subr.mxu0 0.0
    %1609 = vmatpush1.msra.mxu0 0.0
    %1610 = vmatprep.subr.mxu0 0.0
    %1611 = vmatpush1.msra.mxu0 0.0
    %1612 = vmatprep.subr.mxu0 0.0
    %1613 = vmatpush1.msra.mxu0 0.0
    %1614 = vmatprep.subr.mxu0 0.0
    %1615 = vmatpush1.msra.mxu0 0.0
    %1616 = vmatprep.subr.mxu0 0.0
    %1617 = vmatpush1.msra.mxu0 0.0
    %1618 = vmatprep.subr.mxu0 0.0
    %1619 = vmatpush1.msra.mxu0 0.0
    %1620 = vmatprep.mubr.f32.mxu0 0.0
    %1621 = vmatmul.mubr.f32.gmra.mrb[0].mxu0 %v1554
    %v1622 = vpop.f32.mrb[0].mxu0
    %v1623 = vadd.f32 0.0, %v1622
    %v1624 = vpop.f32.mrb[0].mxu0
    %1625 = vdwg.mxu0
    %v1626 = vadd.f32 %v1138, %v1623
    %v1627 = vxor.u32 %v1626, 2147483648
    %v1628 = vmul.f32 %v1627, 1.442695
    %v1629 = vpow.pop %v1628
    %v1630 = vadd.f32 %v1629, 1.0
    %v1631 = vrcp.pop %v1630
    %v1632 = vmul.f32 1.0, %v1631
    %v1633 = vtanh.pop %v1626
    %v1634 = vmul.f32 %v1632, %v1544
    %1636 = vrot.lane.b32.xlu0 %v1633, 64
    %v1637 = vpop.permute.xlu0 %1636
    %v1639 = vmul.f32 %v1632, %v1637
    %1641 = vrot.lane.b32.xlu0 %v1639, 32
    %v1642 = vpop.permute.xlu0 %1641
    %v1644 = vadd.f32 %v1634, %v1642
    %v1645 = vtanh.pop %v1644
    %1647 = vrot.lane.b32.xlu0 %v1645, 64
    %v1648 = vpop.permute.xlu0 %1647
    %v1650 = vmul.f32 %v1632, %v1648
    %1652 = vrot.lane.b32.xlu0 %v1650, 32
    %v1653 = vpop.permute.xlu0 %1652
    %v1654 = vsel %vm100, %v1653, 0
    %1656 = vmatprep.subr.mxu0 0.0
    %1657 = vmatpush1.msra.mxu0 %v1034
    %1658 = vmatprep.subr.mxu0 0.0
    %1659 = vmatpush1.msra.mxu0 %v1035
    %1660 = vmatprep.subr.mxu0 0.0
    %1661 = vmatpush1.msra.mxu0 %v1036
    %1662 = vmatprep.subr.mxu0 0.0
    %1663 = vmatpush1.msra.mxu0 %v1037
    %1664 = vmatprep.subr.mxu0 0.0
    %1665 = vmatpush1.msra.mxu0 0.0
    %1666 = vmatprep.subr.mxu0 0.0
    %1667 = vmatpush1.msra.mxu0 0.0
    %1668 = vmatprep.subr.mxu0 0.0
    %1669 = vmatpush1.msra.mxu0 0.0
    %1670 = vmatprep.subr.mxu0 0.0
    %1671 = vmatpush1.msra.mxu0 0.0
    %1672 = vmatprep.subr.mxu0 0.0
    %1673 = vmatpush1.msra.mxu0 0.0
    %1674 = vmatprep.subr.mxu0 0.0
    %1675 = vmatpush1.msra.mxu0 0.0
    %1676 = vmatprep.subr.mxu0 0.0
    %1677 = vmatpush1.msra.mxu0 0.0
    %1678 = vmatprep.subr.mxu0 0.0
    %1679 = vmatpush1.msra.mxu0 0.0
    %1680 = vmatprep.subr.mxu0 0.0
    %1681 = vmatpush1.msra.mxu0 0.0
    %1682 = vmatprep.subr.mxu0 0.0
    %1683 = vmatpush1.msra.mxu0 0.0
    %1684 = vmatprep.subr.mxu0 0.0
    %1685 = vmatpush1.msra.mxu0 0.0
    %1686 = vmatprep.subr.mxu0 0.0
    %1687 = vmatpush1.msra.mxu0 0.0
    %1688 = vmatprep.subr.mxu0 0.0
    %1689 = vmatpush1.msra.mxu0 0.0
    %1690 = vmatprep.subr.mxu0 0.0
    %1691 = vmatpush1.msra.mxu0 0.0
    %1692 = vmatprep.subr.mxu0 0.0
    %1693 = vmatpush1.msra.mxu0 0.0
    %1694 = vmatprep.subr.mxu0 0.0
    %1695 = vmatpush1.msra.mxu0 0.0
    %1696 = vmatprep.subr.mxu0 0.0
    %1697 = vmatpush1.msra.mxu0 0.0
    %1698 = vmatprep.subr.mxu0 0.0
    %1699 = vmatpush1.msra.mxu0 0.0
    %1700 = vmatprep.subr.mxu0 0.0
    %1701 = vmatpush1.msra.mxu0 0.0
    %1702 = vmatprep.subr.mxu0 0.0
    %1703 = vmatpush1.msra.mxu0 0.0
    %1704 = vmatprep.subr.mxu0 0.0
    %1705 = vmatpush1.msra.mxu0 0.0
    %1706 = vmatprep.subr.mxu0 0.0
    %1707 = vmatpush1.msra.mxu0 0.0
    %1708 = vmatprep.subr.mxu0 0.0
    %1709 = vmatpush1.msra.mxu0 0.0
    %1710 = vmatprep.subr.mxu0 0.0
    %1711 = vmatpush1.msra.mxu0 0.0
    %1712 = vmatprep.subr.mxu0 0.0
    %1713 = vmatpush1.msra.mxu0 0.0
    %1714 = vmatprep.subr.mxu0 0.0
    %1715 = vmatpush1.msra.mxu0 0.0
    %1716 = vmatprep.subr.mxu0 0.0
    %1717 = vmatpush1.msra.mxu0 0.0
    %1718 = vmatprep.subr.mxu0 0.0
    %1719 = vmatpush1.msra.mxu0 0.0
    %1720 = vmatprep.mubr.f32.mxu0 0.0
    %1721 = vmatmul.mubr.f32.gmra.mrb[0].mxu0 %v1654
    %v1722 = vpop.f32.mrb[0].mxu0
    %v1723 = vadd.f32 0.0, %v1722
    %v1724 = vpop.f32.mrb[0].mxu0
    %1725 = vdwg.mxu0
    %v1726 = vadd.f32 %v1143, %v1723
    %v1727 = vxor.u32 %v1726, 2147483648
    %v1728 = vmul.f32 %v1727, 1.442695
    %v1729 = vpow.pop %v1728
    %v1730 = vadd.f32 %v1729, 1.0
    %v1731 = vrcp.pop %v1730
    %v1732 = vmul.f32 1.0, %v1731
    %v1733 = vtanh.pop %v1726
    %v1734 = vmul.f32 %v1732, %v1644
    %1736 = vrot.lane.b32.xlu0 %v1733, 64
    %v1737 = vpop.permute.xlu0 %1736
    %v1739 = vmul.f32 %v1732, %v1737
    %1741 = vrot.lane.b32.xlu0 %v1739, 32
    %v1742 = vpop.permute.xlu0 %1741
    %v1744 = vadd.f32 %v1734, %v1742
    %v1745 = vtanh.pop %v1744
    %1747 = vrot.lane.b32.xlu0 %v1745, 64
    %v1748 = vpop.permute.xlu0 %1747
    %v1750 = vmul.f32 %v1732, %v1748
    %1752 = vrot.lane.b32.xlu0 %v1750, 32
    %v1753 = vpop.permute.xlu0 %1752
    %v1754 = vsel %vm100, %v1753, 0
    %1756 = vmatprep.subr.mxu0 0.0
    %1757 = vmatpush1.msra.mxu0 %v1034
    %1758 = vmatprep.subr.mxu0 0.0
    %1759 = vmatpush1.msra.mxu0 %v1035
    %1760 = vmatprep.subr.mxu0 0.0
    %1761 = vmatpush1.msra.mxu0 %v1036
    %1762 = vmatprep.subr.mxu0 0.0
    %1763 = vmatpush1.msra.mxu0 %v1037
    %1764 = vmatprep.subr.mxu0 0.0
    %1765 = vmatpush1.msra.mxu0 0.0
    %1766 = vmatprep.subr.mxu0 0.0
    %1767 = vmatpush1.msra.mxu0 0.0
    %1768 = vmatprep.subr.mxu0 0.0
    %1769 = vmatpush1.msra.mxu0 0.0
    %1770 = vmatprep.subr.mxu0 0.0
    %1771 = vmatpush1.msra.mxu0 0.0
    %1772 = vmatprep.subr.mxu0 0.0
    %1773 = vmatpush1.msra.mxu0 0.0
    %1774 = vmatprep.subr.mxu0 0.0
    %1775 = vmatpush1.msra.mxu0 0.0
    %1776 = vmatprep.subr.mxu0 0.0
    %1777 = vmatpush1.msra.mxu0 0.0
    %1778 = vmatprep.subr.mxu0 0.0
    %1779 = vmatpush1.msra.mxu0 0.0
    %1780 = vmatprep.subr.mxu0 0.0
    %1781 = vmatpush1.msra.mxu0 0.0
    %1782 = vmatprep.subr.mxu0 0.0
    %1783 = vmatpush1.msra.mxu0 0.0
    %1784 = vmatprep.subr.mxu0 0.0
    %1785 = vmatpush1.msra.mxu0 0.0
    %1786 = vmatprep.subr.mxu0 0.0
    %1787 = vmatpush1.msra.mxu0 0.0
    %1788 = vmatprep.subr.mxu0 0.0
    %1789 = vmatpush1.msra.mxu0 0.0
    %1790 = vmatprep.subr.mxu0 0.0
    %1791 = vmatpush1.msra.mxu0 0.0
    %1792 = vmatprep.subr.mxu0 0.0
    %1793 = vmatpush1.msra.mxu0 0.0
    %1794 = vmatprep.subr.mxu0 0.0
    %1795 = vmatpush1.msra.mxu0 0.0
    %1796 = vmatprep.subr.mxu0 0.0
    %1797 = vmatpush1.msra.mxu0 0.0
    %1798 = vmatprep.subr.mxu0 0.0
    %1799 = vmatpush1.msra.mxu0 0.0
    %1800 = vmatprep.subr.mxu0 0.0
    %1801 = vmatpush1.msra.mxu0 0.0
    %1802 = vmatprep.subr.mxu0 0.0
    %1803 = vmatpush1.msra.mxu0 0.0
    %1804 = vmatprep.subr.mxu0 0.0
    %1805 = vmatpush1.msra.mxu0 0.0
    %1806 = vmatprep.subr.mxu0 0.0
    %1807 = vmatpush1.msra.mxu0 0.0
    %1808 = vmatprep.subr.mxu0 0.0
    %1809 = vmatpush1.msra.mxu0 0.0
    %1810 = vmatprep.subr.mxu0 0.0
    %1811 = vmatpush1.msra.mxu0 0.0
    %1812 = vmatprep.subr.mxu0 0.0
    %1813 = vmatpush1.msra.mxu0 0.0
    %1814 = vmatprep.subr.mxu0 0.0
    %1815 = vmatpush1.msra.mxu0 0.0
    %1816 = vmatprep.subr.mxu0 0.0
    %1817 = vmatpush1.msra.mxu0 0.0
    %1818 = vmatprep.subr.mxu0 0.0
    %1819 = vmatpush1.msra.mxu0 0.0
    %1820 = vmatprep.mubr.f32.mxu0 0.0
    %1821 = vmatmul.mubr.f32.gmra.mrb[0].mxu0 %v1754
    %v1822 = vpop.f32.mrb[0].mxu0
    %v1823 = vadd.f32 0.0, %v1822
    %v1824 = vpop.f32.mrb[0].mxu0
    %1825 = vdwg.mxu0
    %v1826 = vadd.f32 %v1148, %v1823
    %v1827 = vxor.u32 %v1826, 2147483648
    %v1828 = vmul.f32 %v1827, 1.442695
    %v1829 = vpow.pop %v1828
    %v1830 = vadd.f32 %v1829, 1.0
    %v1831 = vrcp.pop %v1830
    %v1832 = vmul.f32 1.0, %v1831
    %v1833 = vtanh.pop %v1826
    %v1834 = vmul.f32 %v1832, %v1744
    %1836 = vrot.lane.b32.xlu0 %v1833, 64
    %v1837 = vpop.permute.xlu0 %1836
    %v1839 = vmul.f32 %v1832, %v1837
    %1841 = vrot.lane.b32.xlu0 %v1839, 32
    %v1842 = vpop.permute.xlu0 %1841
    %v1844 = vadd.f32 %v1834, %v1842
    %v1845 = vtanh.pop %v1844
    %1847 = vrot.lane.b32.xlu0 %v1845, 64
    %v1848 = vpop.permute.xlu0 %1847
    %v1850 = vmul.f32 %v1832, %v1848
    %1852 = vrot.lane.b32.xlu0 %v1850, 32
    %v1853 = vpop.permute.xlu0 %1852
    %v1854 = vsel %vm100, %v1853, 0
    %1856 = vmatprep.subr.mxu0 0.0
    %1857 = vmatpush1.msra.mxu0 %v1034
    %1858 = vmatprep.subr.mxu0 0.0
    %1859 = vmatpush1.msra.mxu0 %v1035
    %1860 = vmatprep.subr.mxu0 0.0
    %1861 = vmatpush1.msra.mxu0 %v1036
    %1862 = vmatprep.subr.mxu0 0.0
    %1863 = vmatpush1.msra.mxu0 %v1037
    %1864 = vmatprep.subr.mxu0 0.0
    %1865 = vmatpush1.msra.mxu0 0.0
    %1866 = vmatprep.subr.mxu0 0.0
    %1867 = vmatpush1.msra.mxu0 0.0
    %1868 = vmatprep.subr.mxu0 0.0
    %1869 = vmatpush1.msra.mxu0 0.0
    %1870 = vmatprep.subr.mxu0 0.0
    %1871 = vmatpush1.msra.mxu0 0.0
    %1872 = vmatprep.subr.mxu0 0.0
    %1873 = vmatpush1.msra.mxu0 0.0
    %1874 = vmatprep.subr.mxu0 0.0
    %1875 = vmatpush1.msra.mxu0 0.0
    %1876 = vmatprep.subr.mxu0 0.0
    %1877 = vmatpush1.msra.mxu0 0.0
    %1878 = vmatprep.subr.mxu0 0.0
    %1879 = vmatpush1.msra.mxu0 0.0
    %1880 = vmatprep.subr.mxu0 0.0
    %1881 = vmatpush1.msra.mxu0 0.0
    %1882 = vmatprep.subr.mxu0 0.0
    %1883 = vmatpush1.msra.mxu0 0.0
    %1884 = vmatprep.subr.mxu0 0.0
    %1885 = vmatpush1.msra.mxu0 0.0
    %1886 = vmatprep.subr.mxu0 0.0
    %1887 = vmatpush1.msra.mxu0 0.0
    %1888 = vmatprep.subr.mxu0 0.0
    %1889 = vmatpush1.msra.mxu0 0.0
    %1890 = vmatprep.subr.mxu0 0.0
    %1891 = vmatpush1.msra.mxu0 0.0
    %1892 = vmatprep.subr.mxu0 0.0
    %1893 = vmatpush1.msra.mxu0 0.0
    %1894 = vmatprep.subr.mxu0 0.0
    %1895 = vmatpush1.msra.mxu0 0.0
    %1896 = vmatprep.subr.mxu0 0.0
    %1897 = vmatpush1.msra.mxu0 0.0
    %1898 = vmatprep.subr.mxu0 0.0
    %1899 = vmatpush1.msra.mxu0 0.0
    %1900 = vmatprep.subr.mxu0 0.0
    %1901 = vmatpush1.msra.mxu0 0.0
    %1902 = vmatprep.subr.mxu0 0.0
    %1903 = vmatpush1.msra.mxu0 0.0
    %1904 = vmatprep.subr.mxu0 0.0
    %1905 = vmatpush1.msra.mxu0 0.0
    %1906 = vmatprep.subr.mxu0 0.0
    %1907 = vmatpush1.msra.mxu0 0.0
    %1908 = vmatprep.subr.mxu0 0.0
    %1909 = vmatpush1.msra.mxu0 0.0
    %1910 = vmatprep.subr.mxu0 0.0
    %1911 = vmatpush1.msra.mxu0 0.0
    %1912 = vmatprep.subr.mxu0 0.0
    %1913 = vmatpush1.msra.mxu0 0.0
    %1914 = vmatprep.subr.mxu0 0.0
    %1915 = vmatpush1.msra.mxu0 0.0
    %1916 = vmatprep.subr.mxu0 0.0
    %1917 = vmatpush1.msra.mxu0 0.0
    %1918 = vmatprep.subr.mxu0 0.0
    %1919 = vmatpush1.msra.mxu0 0.0
    %1920 = vmatprep.mubr.f32.mxu0 0.0
    %1921 = vmatmul.mubr.f32.gmra.mrb[0].mxu0 %v1854
    %v1922 = vpop.f32.mrb[0].mxu0
    %v1923 = vadd.f32 0.0, %v1922
    %v1924 = vpop.f32.mrb[0].mxu0
    %1925 = vdwg.mxu0
    %v1926 = vadd.f32 %v1153, %v1923
    %v1927 = vxor.u32 %v1926, 2147483648
    %v1928 = vmul.f32 %v1927, 1.442695
    %v1929 = vpow.pop %v1928
    %v1930 = vadd.f32 %v1929, 1.0
    %v1931 = vrcp.pop %v1930
    %v1932 = vmul.f32 1.0, %v1931
    %v1933 = vtanh.pop %v1926
    %v1934 = vmul.f32 %v1932, %v1844
    %1936 = vrot.lane.b32.xlu0 %v1933, 64
    %v1937 = vpop.permute.xlu0 %1936
    %v1939 = vmul.f32 %v1932, %v1937
    %1941 = vrot.lane.b32.xlu0 %v1939, 32
    %v1942 = vpop.permute.xlu0 %1941
    %v1944 = vadd.f32 %v1934, %v1942
    %v1945 = vtanh.pop %v1944
    %1947 = vrot.lane.b32.xlu0 %v1945, 64
    %v1948 = vpop.permute.xlu0 %1947
    %v1950 = vmul.f32 %v1932, %v1948
    %vm1951 = vcmp.gt.f32.partialorder %v1950, 0.0
    %v1952 = vmul.f32 %v1950, 0.01
    %v1953 = vsel %vm1951, %v1950, %v1952
    %v1954 = vld [vmem:[%s4] sm:$0xff]
    %v1955 = vld [vmem:[%s4 + $0x8] sm:$0xff]
    %v1956 = vld [vmem:[%s4 + $0x10] sm:$0xff]
    %v1957 = vld [vmem:[%s4 + $0x18] sm:$0xff]
    %v1958 = vld [vmem:[%s5] sm:$0x1]
    %v1960 = vlaneseq
    %v1961 = vshrl.u32 %v1960, 7
    %v1962 = vsub.s32 0, %v1961
    %v1963 = vrot.slane %v1958, %v1962
    %1966 = vrot.lane.b32.xlu0 %v1953, 32
    %v1967 = vpop.permute.xlu0 %1966
    %v1968 = vsel %vm100, %v1967, 0
    %1970 = vmatprep.subr.mxu0 0.0
    %1971 = vmatpush1.msra.mxu0 %v1954
    %1972 = vmatprep.subr.mxu0 0.0
    %1973 = vmatpush1.msra.mxu0 %v1955
    %1974 = vmatprep.subr.mxu0 0.0
    %1975 = vmatpush1.msra.mxu0 %v1956
    %1976 = vmatprep.subr.mxu0 0.0
    %1977 = vmatpush1.msra.mxu0 %v1957
    %1978 = vmatprep.subr.mxu0 0.0
    %1979 = vmatpush1.msra.mxu0 0.0
    %1980 = vmatprep.subr.mxu0 0.0
    %1981 = vmatpush1.msra.mxu0 0.0
    %1982 = vmatprep.subr.mxu0 0.0
    %1983 = vmatpush1.msra.mxu0 0.0
    %1984 = vmatprep.subr.mxu0 0.0
    %1985 = vmatpush1.msra.mxu0 0.0
    %1986 = vmatprep.subr.mxu0 0.0
    %1987 = vmatpush1.msra.mxu0 0.0
    %1988 = vmatprep.subr.mxu0 0.0
    %1989 = vmatpush1.msra.mxu0 0.0
    %1990 = vmatprep.subr.mxu0 0.0
    %1991 = vmatpush1.msra.mxu0 0.0
    %1992 = vmatprep.subr.mxu0 0.0
    %1993 = vmatpush1.msra.mxu0 0.0
    %1994 = vmatprep.subr.mxu0 0.0
    %1995 = vmatpush1.msra.mxu0 0.0
    %1996 = vmatprep.subr.mxu0 0.0
    %1997 = vmatpush1.msra.mxu0 0.0
    %1998 = vmatprep.subr.mxu0 0.0
    %1999 = vmatpush1.msra.mxu0 0.0
    %2000 = vmatprep.subr.mxu0 0.0
    %2001 = vmatpush1.msra.mxu0 0.0
    %2002 = vmatprep.subr.mxu0 0.0
    %2003 = vmatpush1.msra.mxu0 0.0
    %2004 = vmatprep.subr.mxu0 0.0
    %2005 = vmatpush1.msra.mxu0 0.0
    %2006 = vmatprep.subr.mxu0 0.0
    %2007 = vmatpush1.msra.mxu0 0.0
    %2008 = vmatprep.subr.mxu0 0.0
    %2009 = vmatpush1.msra.mxu0 0.0
    %2010 = vmatprep.subr.mxu0 0.0
    %2011 = vmatpush1.msra.mxu0 0.0
    %2012 = vmatprep.subr.mxu0 0.0
    %2013 = vmatpush1.msra.mxu0 0.0
    %2014 = vmatprep.subr.mxu0 0.0
    %2015 = vmatpush1.msra.mxu0 0.0
    %2016 = vmatprep.subr.mxu0 0.0
    %2017 = vmatpush1.msra.mxu0 0.0
    %2018 = vmatprep.subr.mxu0 0.0
    %2019 = vmatpush1.msra.mxu0 0.0
    %2020 = vmatprep.subr.mxu0 0.0
    %2021 = vmatpush1.msra.mxu0 0.0
    %2022 = vmatprep.subr.mxu0 0.0
    %2023 = vmatpush1.msra.mxu0 0.0
    %2024 = vmatprep.subr.mxu0 0.0
    %2025 = vmatpush1.msra.mxu0 0.0
    %2026 = vmatprep.subr.mxu0 0.0
    %2027 = vmatpush1.msra.mxu0 0.0
    %2028 = vmatprep.subr.mxu0 0.0
    %2029 = vmatpush1.msra.mxu0 0.0
    %2030 = vmatprep.subr.mxu0 0.0
    %2031 = vmatpush1.msra.mxu0 0.0
    %2032 = vmatprep.subr.mxu0 0.0
    %2033 = vmatpush1.msra.mxu0 0.0
    %2034 = vmatprep.mubr.f32.mxu0 0.0
    %2035 = vmatmul.mubr.f32.gmra.mrb[0].mxu0 %v1968
    %v2036 = vpop.f32.mrb[0].mxu0
    %v2037 = vadd.f32 %v1963, %v2036
    %v2038 = vpop.f32.mrb[0].mxu0
    %2039 = vdwg.mxu0
    %vm2040 = vcmp.gt.f32.partialorder %v2037, 0.0
    %v2041 = vmul.f32 %v2037, 0.01
    %v2042 = vsel %vm2040, %v2037, %v2041
    %v2043 = vld [vmem:[%s6] sm:$0xff]
    %v2044 = vld [vmem:[%s6 + $0x8] sm:$0xff]
    %v2045 = vld [vmem:[%s6 + $0x10] sm:$0xff]
    %v2046 = vld [vmem:[%s6 + $0x18] sm:$0xff]
    %v2047 = vld [vmem:[%s7] sm:$0x1]
    %v2049 = vlaneseq
    %v2050 = vshrl.u32 %v2049, 7
    %v2051 = vsub.s32 0, %v2050
    %v2052 = vrot.slane %v2047, %v2051
    %v2055 = vsel %vm100, %v2042, 0
    %2057 = vmatprep.subr.mxu0 0.0
    %2058 = vmatpush1.msra.mxu0 %v2043
    %2059 = vmatprep.subr.mxu0 0.0
    %2060 = vmatpush1.msra.mxu0 %v2044
    %2061 = vmatprep.subr.mxu0 0.0
    %2062 = vmatpush1.msra.mxu0 %v2045
    %2063 = vmatprep.subr.mxu0 0.0
    %2064 = vmatpush1.msra.mxu0 %v2046
    %2065 = vmatprep.subr.mxu0 0.0
    %2066 = vmatpush1.msra.mxu0 0.0
    %2067 = vmatprep.subr.mxu0 0.0
    %2068 = vmatpush1.msra.mxu0 0.0
    %2069 = vmatprep.subr.mxu0 0.0
    %2070 = vmatpush1.msra.mxu0 0.0
    %2071 = vmatprep.subr.mxu0 0.0
    %2072 = vmatpush1.msra.mxu0 0.0
    %2073 = vmatprep.subr.mxu0 0.0
    %2074 = vmatpush1.msra.mxu0 0.0
    %2075 = vmatprep.subr.mxu0 0.0
    %2076 = vmatpush1.msra.mxu0 0.0
    %2077 = vmatprep.subr.mxu0 0.0
    %2078 = vmatpush1.msra.mxu0 0.0
    %2079 = vmatprep.subr.mxu0 0.0
    %2080 = vmatpush1.msra.mxu0 0.0
    %2081 = vmatprep.subr.mxu0 0.0
    %2082 = vmatpush1.msra.mxu0 0.0
    %2083 = vmatprep.subr.mxu0 0.0
    %2084 = vmatpush1.msra.mxu0 0.0
    %2085 = vmatprep.subr.mxu0 0.0
    %2086 = vmatpush1.msra.mxu0 0.0
    %2087 = vmatprep.subr.mxu0 0.0
    %2088 = vmatpush1.msra.mxu0 0.0
    %2089 = vmatprep.subr.mxu0 0.0
    %2090 = vmatpush1.msra.mxu0 0.0
    %2091 = vmatprep.subr.mxu0 0.0
    %2092 = vmatpush1.msra.mxu0 0.0
    %2093 = vmatprep.subr.mxu0 0.0
    %2094 = vmatpush1.msra.mxu0 0.0
    %2095 = vmatprep.subr.mxu0 0.0
    %2096 = vmatpush1.msra.mxu0 0.0
    %2097 = vmatprep.subr.mxu0 0.0
    %2098 = vmatpush1.msra.mxu0 0.0
    %2099 = vmatprep.subr.mxu0 0.0
    %2100 = vmatpush1.msra.mxu0 0.0
    %2101 = vmatprep.subr.mxu0 0.0
    %2102 = vmatpush1.msra.mxu0 0.0
    %2103 = vmatprep.subr.mxu0 0.0
    %2104 = vmatpush1.msra.mxu0 0.0
    %2105 = vmatprep.subr.mxu0 0.0
    %2106 = vmatpush1.msra.mxu0 0.0
    %2107 = vmatprep.subr.mxu0 0.0
    %2108 = vmatpush1.msra.mxu0 0.0
    %2109 = vmatprep.subr.mxu0 0.0
    %2110 = vmatpush1.msra.mxu0 0.0
    %2111 = vmatprep.subr.mxu0 0.0
    %2112 = vmatpush1.msra.mxu0 0.0
    %2113 = vmatprep.subr.mxu0 0.0
    %2114 = vmatpush1.msra.mxu0 0.0
    %2115 = vmatprep.subr.mxu0 0.0
    %2116 = vmatpush1.msra.mxu0 0.0
    %2117 = vmatprep.subr.mxu0 0.0
    %2118 = vmatpush1.msra.mxu0 0.0
    %2119 = vmatprep.subr.mxu0 0.0
    %2120 = vmatpush1.msra.mxu0 0.0
    %2121 = vmatprep.mubr.f32.mxu0 0.0
    %2122 = vmatmul.mubr.f32.gmra.mrb[0].mxu0 %v2055
    %v2123 = vpop.f32.mrb[0].mxu0
    %v2124 = vadd.f32 %v2052, %v2123
    %v2125 = vpop.f32.mrb[0].mxu0
    %2126 = vdwg.mxu0
    %vm2127 = vcmp.gt.f32.partialorder %v2124, 0.0
    %v2128 = vmul.f32 %v2124, 0.01
    %v2129 = vsel %vm2127, %v2124, %v2128
    %v2130 = vld [vmem:[%s8] sm:$0xff]
    %v2131 = vld [vmem:[%s8 + $0x8] sm:$0xff]
    %v2132 = vld [vmem:[%s9] sm:$0x1]
    %v2134 = vlaneseq
    %v2135 = vshrl.u32 %v2134, 7
    %v2136 = vsub.s32 0, %v2135
    %v2137 = vrot.slane %v2132, %v2136
    %vm2139 = vcmask 130048
    %v2141 = vsel %vm2139, %v2129, 0
    %2143 = vmatprep.subr.mxu0 0.0
    %2144 = vmatpush1.msra.mxu0 %v2130
    %2145 = vmatprep.subr.mxu0 0.0
    %2146 = vmatpush1.msra.mxu0 %v2131
    %2147 = vmatprep.subr.mxu0 0.0
    %2148 = vmatpush1.msra.mxu0 0.0
    %2149 = vmatprep.subr.mxu0 0.0
    %2150 = vmatpush1.msra.mxu0 0.0
    %2151 = vmatprep.subr.mxu0 0.0
    %2152 = vmatpush1.msra.mxu0 0.0
    %2153 = vmatprep.subr.mxu0 0.0
    %2154 = vmatpush1.msra.mxu0 0.0
    %2155 = vmatprep.subr.mxu0 0.0
    %2156 = vmatpush1.msra.mxu0 0.0
    %2157 = vmatprep.subr.mxu0 0.0
    %2158 = vmatpush1.msra.mxu0 0.0
    %2159 = vmatprep.subr.mxu0 0.0
    %2160 = vmatpush1.msra.mxu0 0.0
    %2161 = vmatprep.subr.mxu0 0.0
    %2162 = vmatpush1.msra.mxu0 0.0
    %2163 = vmatprep.subr.mxu0 0.0
    %2164 = vmatpush1.msra.mxu0 0.0
    %2165 = vmatprep.subr.mxu0 0.0
    %2166 = vmatpush1.msra.mxu0 0.0
    %2167 = vmatprep.subr.mxu0 0.0
    %2168 = vmatpush1.msra.mxu0 0.0
    %2169 = vmatprep.subr.mxu0 0.0
    %2170 = vmatpush1.msra.mxu0 0.0
    %2171 = vmatprep.subr.mxu0 0.0
    %2172 = vmatpush1.msra.mxu0 0.0
    %2173 = vmatprep.subr.mxu0 0.0
    %2174 = vmatpush1.msra.mxu0 0.0
    %2175 = vmatprep.subr.mxu0 0.0
    %2176 = vmatpush1.msra.mxu0 0.0
    %2177 = vmatprep.subr.mxu0 0.0
    %2178 = vmatpush1.msra.mxu0 0.0
    %2179 = vmatprep.subr.mxu0 0.0
    %2180 = vmatpush1.msra.mxu0 0.0
    %2181 = vmatprep.subr.mxu0 0.0
    %2182 = vmatpush1.msra.mxu0 0.0
    %2183 = vmatprep.subr.mxu0 0.0
    %2184 = vmatpush1.msra.mxu0 0.0
    %2185 = vmatprep.subr.mxu0 0.0
    %2186 = vmatpush1.msra.mxu0 0.0
    %2187 = vmatprep.subr.mxu0 0.0
    %2188 = vmatpush1.msra.mxu0 0.0
    %2189 = vmatprep.subr.mxu0 0.0
    %2190 = vmatpush1.msra.mxu0 0.0
    %2191 = vmatprep.subr.mxu0 0.0
    %2192 = vmatpush1.msra.mxu0 0.0
    %2193 = vmatprep.subr.mxu0 0.0
    %2194 = vmatpush1.msra.mxu0 0.0
    %2195 = vmatprep.subr.mxu0 0.0
    %2196 = vmatpush1.msra.mxu0 0.0
    %2197 = vmatprep.subr.mxu0 0.0
    %2198 = vmatpush1.msra.mxu0 0.0
    %2199 = vmatprep.subr.mxu0 0.0
    %2200 = vmatpush1.msra.mxu0 0.0
    %2201 = vmatprep.subr.mxu0 0.0
    %2202 = vmatpush1.msra.mxu0 0.0
    %2203 = vmatprep.subr.mxu0 0.0
    %2204 = vmatpush1.msra.mxu0 0.0
    %2205 = vmatprep.subr.mxu0 0.0
    %2206 = vmatpush1.msra.mxu0 0.0
    %2207 = vmatprep.mubr.f32.mxu0 0.0
    %2208 = vmatmul.mubr.f32.gmra.mrb[0].mxu0 %v2141
    %v2209 = vpop.f32.mrb[0].mxu0
    %v2210 = vadd.f32 %v2137, %v2209
    %v2211 = vpop.f32.mrb[0].mxu0
    %2212 = vdwg.mxu0
    %2213 = vst [vmem:[#allocation8] sm:$0xff] %v2210
    // Predicated region
    $region54: #{tpu_custom_call.1} parent=1 // pred_check
      _
    $region55: #{tpu_custom_call.1} parent=1 // pred_check_branch
      %2215 = sbr.rel (0) target = $region57
    $region56: #{tpu_custom_call.1} parent=1 // pred_region
      %s2217 = ssub.s32 128, 128
      %2218 = vsyncadd [#allocation4], %s2217
      %s2220 = sshll.u32 [#allocation8], 4
      %s2221 = int_to_ptr.vmem [resolvable:$true] %s2220
      %2223 = dma.vmem_to_hbm [thread:$0]  %s2221, 128, %s10, [#allocation4]
    $region57: #{tpu_custom_call.1} parent=1 // pred_fallthru
      _
    // Predicated region
    $region58: #{tpu_custom_call.1} parent=1 // pred_check
      _
    $region59: #{tpu_custom_call.1} parent=1 // pred_check_branch
      %2225 = sbr.rel (0) target = $region61
    $region60: #{tpu_custom_call.1} parent=1 // pred_region
      %2226 = dma.done [#allocation4], 128
    $region61: #{tpu_custom_call.1} parent=1 // pred_fallthru
      _
    %2227 = vsyncpa [#allocation3], 1
    %2228 = vsyncpa [#allocation6], 1
    %2229 = vsyncpa [#allocation4], 1

</llo_original>
